<compile_context>
chip_gen: v6e
topology: v6e:2x2x1
jax: 0.10.0
libtpu: 0.0.40
codegen_flags: <defaults>
</compile_context>

<pallas_src>
import math

import jax
import jax.numpy as jnp
from jax import lax
from jax.experimental import pallas as pl
from jax.experimental.pallas import tpu as pltpu


# ------------------------------- Pallas kernel -------------------------------

def self_attn_bot_kernel(x_ref, pe_ref,
                         wq_ref, bq_ref, wk_ref, bk_ref, wv_ref, bv_ref,
                         gamma_ref,
                         w1_ref, b1_ref, w2_ref, b2_ref, w3_ref, b3_ref,
                         o_ref):
    """Fused Self_Attn_Bot.forward for one batch element.

    x_ref  : (1, N, C)  input features
    pe_ref : (1, N, C)  positional-encoding buffer (already * pe_scale_factor)
    w*_ref : linear weights stored (in, out);  b*_ref: (1, out);  gamma: (1, 1)
    o_ref  : (1, N, C)
    """
    # Positional encoding (dropout is identity in eval mode).
    x = x_ref[0].astype(jnp.float32) + pe_ref[0]                       # (N, C)

    # Q / K / V projections — large-K (K = C) MXU matmuls, f32 accumulate.
    q = jnp.dot(x, wq_ref[...], preferred_element_type=jnp.float32) + bq_ref[...]
    k = jnp.dot(x, wk_ref[...], preferred_element_type=jnp.float32) + bk_ref[...]
    v = jnp.dot(x, wv_ref[...], preferred_element_type=jnp.float32) + bv_ref[...]

    # energy = Q K^T: contract over C via dot_general (no materialized transpose).
    energy = lax.dot_general(q, k, (((1,), (1,)), ((), ())),
                             preferred_element_type=jnp.float32)       # (N, N)

    # softmax along the last dim (matches torch.nn.Softmax(dim=-1)).
    m = jnp.max(energy, axis=-1, keepdims=True)
    p = jnp.exp(energy - m)
    attn = p * pl.reciprocal(jnp.sum(p, axis=-1, keepdims=True), approx=False)

    # out = A @ V  (equivalent to the bmm/permute dance in the PyTorch code).
    out = jnp.dot(attn, v, preferred_element_type=jnp.float32)          # (N, C)
    out = gamma_ref[...] * out + x                                      # gamma * out + residual

    # Bottleneck_Perceptron_3_layer_res: Linear+ReLU -> Linear+ReLU -> Linear, +res.
    h = jnp.maximum(
        jnp.dot(out, w1_ref[...], preferred_element_type=jnp.float32) + b1_ref[...],
        0.0)
    h = jnp.maximum(
        jnp.dot(h, w2_ref[...], preferred_element_type=jnp.float32) + b2_ref[...],
        0.0)
    y = jnp.dot(h, w3_ref[...], preferred_element_type=jnp.float32) + b3_ref[...] + out

    o_ref[0] = y.astype(o_ref.dtype)


# ---------------------------- pallas_call wrapper -----------------------------

def self_attn_bot(x, pe, params):
    """x: (B, N, C) float32, pe: (1, N, C), params: dict of weights/biases."""
    B, N, C = x.shape
    H = params["w1"].shape[1]                       # bottleneck hidden = C // 2
    return pl.pallas_call(
        self_attn_bot_kernel,
        out_shape=jax.ShapeDtypeStruct((B, N, C), jnp.float32),
        grid=(B,),
        in_specs=[
            pl.BlockSpec((1, N, C), lambda b: (b, 0, 0)),   # x        (per-batch)
            pl.BlockSpec((1, N, C), lambda b: (0, 0, 0)),   # pe       (shared)
            pl.BlockSpec((C, C), lambda b: (0, 0)),         # wq
            pl.BlockSpec((1, C), lambda b: (0, 0)),         # bq
            pl.BlockSpec((C, C), lambda b: (0, 0)),         # wk
            pl.BlockSpec((1, C), lambda b: (0, 0)),         # bk
            pl.BlockSpec((C, C), lambda b: (0, 0)),         # wv
            pl.BlockSpec((1, C), lambda b: (0, 0)),         # bv
            pl.BlockSpec((1, 1), lambda b: (0, 0)),         # gamma
            pl.BlockSpec((C, H), lambda b: (0, 0)),         # w1
            pl.BlockSpec((1, H), lambda b: (0, 0)),         # b1
            pl.BlockSpec((H, H), lambda b: (0, 0)),         # w2
            pl.BlockSpec((1, H), lambda b: (0, 0)),         # b2
            pl.BlockSpec((H, C), lambda b: (0, 0)),         # w3
            pl.BlockSpec((1, C), lambda b: (0, 0)),         # b3
        ],
        out_specs=pl.BlockSpec((1, N, C), lambda b: (b, 0, 0)),
        compiler_params=pltpu.CompilerParams(
            dimension_semantics=("parallel",)),
    )(x, pe,
      params["wq"], params["bq"], params["wk"], params["bk"],
      params["wv"], params["bv"], params["gamma"],
      params["w1"], params["b1"], params["w2"], params["b2"],
      params["w3"], params["b3"])


# ------------------------------- model glue ----------------------------------

def make_positional_encoding(n, d_model, pe_scale_factor=0.1):
    """PositionalEncoding buffer, identical to the PyTorch construction."""
    position = jnp.arange(n, dtype=jnp.float32)[:, None]                     # (n, 1)
    div_term = jnp.exp(jnp.arange(0, d_model, 2, dtype=jnp.float32)
                       * (-math.log(10000.0) / d_model))                     # (d/2,)
    ang = position * div_term                                                # (n, d/2)
    pe = jnp.zeros((n, d_model), jnp.float32)
    pe = pe.at[:, 0::2].set(jnp.sin(ang) * pe_scale_factor)
    pe = pe.at[:, 1::2].set(jnp.cos(ang) * pe_scale_factor)
    return pe[None]                                                          # (1, n, d)


def init_self_attn_bot_params(key, in_dim):
    """Synthetic parameters mirroring Self_Attn_Bot.__init__ shapes.

    Linear weights are stored (in, out) (i.e. PyTorch weight transposed) so the
    kernel can use them directly as matmul RHS.
    """
    hid = in_dim // 2
    ks = jax.random.split(key, 12)

    def lin(kw, kb, fan_in, fan_out):
        lim = 1.0 / math.sqrt(fan_in)
        w = jax.random.uniform(kw, (fan_in, fan_out), jnp.float32, -lim, lim)
        b = jax.random.uniform(kb, (1, fan_out), jnp.float32, -lim, lim)
        return w, b

    wq, bq = lin(ks[0], ks[1], in_dim, in_dim)
    wk, bk = lin(ks[2], ks[3], in_dim, in_dim)
    wv, bv = lin(ks[4], ks[5], in_dim, in_dim)
    w1, b1 = lin(ks[6], ks[7], in_dim, hid)
    w2, b2 = lin(ks[8], ks[9], hid, hid)
    w3, b3 = lin(ks[10], ks[11], hid, in_dim)

    # PyTorch initializes gamma = 0 (attention branch off); use a nonzero
    # synthetic value so the attention path is actually exercised and checked.
    gamma = jnp.full((1, 1), 0.5, jnp.float32)

    return dict(wq=wq, bq=bq, wk=wk, bk=bk, wv=wv, bv=bv, gamma=gamma,
                w1=w1, b1=b1, w2=w2, b2=b2, w3=w3, b3=b3)


def self_attn_bot_ref(x, pe, params):
    """Pure-JAX reference (mirrors the PyTorch forward in eval mode)."""
    xb = x + pe
    q = xb @ params["wq"] + params["bq"]
    k = xb @ params["wk"] + params["bk"]
    v = xb @ params["wv"] + params["bv"]
    energy = jnp.einsum("bnc,bmc->bnm", q, k)
    attn = jax.nn.softmax(energy, axis=-1)
    out = jnp.einsum("bnm,bmc->bnc", attn, v)
    out = params["gamma"][0, 0] * out + xb
    h = jax.nn.relu(out @ params["w1"] + params["b1"])
    h = jax.nn.relu(h @ params["w2"] + params["b2"])
    return h @ params["w3"] + params["b3"] + out


# ---------------------------------- main --------------------------------------

if __name__ == "__main__":
    key = jax.random.PRNGKey(0)
    kx, kp = jax.random.split(key)

    # Small shapes consistent with the module: (batch, seq_len frames, in_dim).
    # The real model uses (B, 16, 2048); keep seq_len=16 and shrink in_dim.
    B, N, C = 2, 16, 256
    x = jax.random.normal(kx, (B, N, C), jnp.float32)
    params = init_self_attn_bot_params(kp, C)
    pe = make_positional_encoding(N, C)

    fwd = jax.jit(lambda xx: self_attn_bot(xx, pe, params))
    out = fwd(x)
    jax.block_until_ready(out)

    ref = self_attn_bot_ref(x, pe, params)
    assert out.shape == (B, N, C)
    assert bool(jnp.all(jnp.isfinite(out)))
    assert bool(jnp.allclose(out, ref, atol=2e-3, rtol=2e-3)), \
        float(jnp.max(jnp.abs(out - ref)))
    print("KERNEL_OK")
</pallas_src>

<mosaic_0001>
module attributes {stable_mosaic.version = 11 : i64} {
  func.func @self_attn_bot_kernel(%arg0: i32, %arg1: memref<1x16x256xf32, #tpu.memory_space<vmem>>, %arg2: memref<1x16x256xf32, #tpu.memory_space<vmem>>, %arg3: memref<256x256xf32, #tpu.memory_space<vmem>>, %arg4: memref<1x256xf32, #tpu.memory_space<vmem>>, %arg5: memref<256x256xf32, #tpu.memory_space<vmem>>, %arg6: memref<1x256xf32, #tpu.memory_space<vmem>>, %arg7: memref<256x256xf32, #tpu.memory_space<vmem>>, %arg8: memref<1x256xf32, #tpu.memory_space<vmem>>, %arg9: memref<1x1xf32, #tpu.memory_space<vmem>>, %arg10: memref<256x128xf32, #tpu.memory_space<vmem>>, %arg11: memref<1x128xf32, #tpu.memory_space<vmem>>, %arg12: memref<128x128xf32, #tpu.memory_space<vmem>>, %arg13: memref<1x128xf32, #tpu.memory_space<vmem>>, %arg14: memref<128x256xf32, #tpu.memory_space<vmem>>, %arg15: memref<1x256xf32, #tpu.memory_space<vmem>>, %arg16: memref<1x16x256xf32, #tpu.memory_space<vmem>>) attributes {dimension_semantics = [#tpu.dimension_semantics<parallel>], iteration_bounds = array<i64: 2>, scalar_prefetch = 0 : i64, scratch_operands = 0 : i64, tpu.core_type = #tpu.core_type<tc>, window_params = [{transform_indices = @transform_0, window_bounds = array<i64: 1, 16, 256>}, {pipeline_mode = #tpu.pipeline_mode<synchronous>, transform_indices = @transform_1, window_bounds = array<i64: 1, 16, 256>}, {pipeline_mode = #tpu.pipeline_mode<synchronous>, transform_indices = @transform_2, window_bounds = array<i64: 256, 256>}, {pipeline_mode = #tpu.pipeline_mode<synchronous>, transform_indices = @transform_3, window_bounds = array<i64: 1, 256>}, {pipeline_mode = #tpu.pipeline_mode<synchronous>, transform_indices = @transform_4, window_bounds = array<i64: 256, 256>}, {pipeline_mode = #tpu.pipeline_mode<synchronous>, transform_indices = @transform_5, window_bounds = array<i64: 1, 256>}, {pipeline_mode = #tpu.pipeline_mode<synchronous>, transform_indices = @transform_6, window_bounds = array<i64: 256, 256>}, {pipeline_mode = #tpu.pipeline_mode<synchronous>, transform_indices = @transform_7, window_bounds = array<i64: 1, 256>}, {pipeline_mode = #tpu.pipeline_mode<synchronous>, transform_indices = @transform_8, window_bounds = array<i64: 1, 1>}, {pipeline_mode = #tpu.pipeline_mode<synchronous>, transform_indices = @transform_9, window_bounds = array<i64: 256, 128>}, {pipeline_mode = #tpu.pipeline_mode<synchronous>, transform_indices = @transform_10, window_bounds = array<i64: 1, 128>}, {pipeline_mode = #tpu.pipeline_mode<synchronous>, transform_indices = @transform_11, window_bounds = array<i64: 128, 128>}, {pipeline_mode = #tpu.pipeline_mode<synchronous>, transform_indices = @transform_12, window_bounds = array<i64: 1, 128>}, {pipeline_mode = #tpu.pipeline_mode<synchronous>, transform_indices = @transform_13, window_bounds = array<i64: 128, 256>}, {pipeline_mode = #tpu.pipeline_mode<synchronous>, transform_indices = @transform_14, window_bounds = array<i64: 1, 256>}, {transform_indices = @transform_15, window_bounds = array<i64: 1, 16, 256>}]} {
    %c0 = arith.constant 0 : index
    %c0_0 = arith.constant 0 : index
    %c0_1 = arith.constant 0 : index
    %0 = vector.load %arg1[%c0, %c0_0, %c0_1] : memref<1x16x256xf32, #tpu.memory_space<vmem>>, vector<1x16x256xf32>
    %1 = vector.shape_cast %0 : vector<1x16x256xf32> to vector<16x256xf32>
    %c0_2 = arith.constant 0 : index
    %c0_3 = arith.constant 0 : index
    %c0_4 = arith.constant 0 : index
    %2 = vector.load %arg2[%c0_2, %c0_3, %c0_4] : memref<1x16x256xf32, #tpu.memory_space<vmem>>, vector<1x16x256xf32>
    %3 = vector.shape_cast %2 : vector<1x16x256xf32> to vector<16x256xf32>
    %4 = arith.addf %1, %3 : vector<16x256xf32>
    %c0_5 = arith.constant 0 : index
    %c0_6 = arith.constant 0 : index
    %5 = vector.load %arg3[%c0_5, %c0_6] : memref<256x256xf32, #tpu.memory_space<vmem>>, vector<256x256xf32>
    %cst = arith.constant dense<0.000000e+00> : vector<16x256xf32>
    %6 = tpu.matmul %4, %5, %cst {dimension_numbers = #tpu.dot_dimension_numbers<[1], [0], [0], [1], [0, 0, 1, 1], [], []>} : vector<16x256xf32>, vector<256x256xf32>, vector<16x256xf32> -> vector<16x256xf32>
    %c0_7 = arith.constant 0 : index
    %c0_8 = arith.constant 0 : index
    %7 = vector.load %arg4[%c0_7, %c0_8] : memref<1x256xf32, #tpu.memory_space<vmem>>, vector<1x256xf32>
    %8 = vector.broadcast %7 : vector<1x256xf32> to vector<16x256xf32>
    %9 = arith.addf %6, %8 : vector<16x256xf32>
    %c0_9 = arith.constant 0 : index
    %c0_10 = arith.constant 0 : index
    %10 = vector.load %arg5[%c0_9, %c0_10] : memref<256x256xf32, #tpu.memory_space<vmem>>, vector<256x256xf32>
    %cst_11 = arith.constant dense<0.000000e+00> : vector<16x256xf32>
    %11 = tpu.matmul %4, %10, %cst_11 {dimension_numbers = #tpu.dot_dimension_numbers<[1], [0], [0], [1], [0, 0, 1, 1], [], []>} : vector<16x256xf32>, vector<256x256xf32>, vector<16x256xf32> -> vector<16x256xf32>
    %c0_12 = arith.constant 0 : index
    %c0_13 = arith.constant 0 : index
    %12 = vector.load %arg6[%c0_12, %c0_13] : memref<1x256xf32, #tpu.memory_space<vmem>>, vector<1x256xf32>
    %13 = vector.broadcast %12 : vector<1x256xf32> to vector<16x256xf32>
    %14 = arith.addf %11, %13 : vector<16x256xf32>
    %c0_14 = arith.constant 0 : index
    %c0_15 = arith.constant 0 : index
    %15 = vector.load %arg7[%c0_14, %c0_15] : memref<256x256xf32, #tpu.memory_space<vmem>>, vector<256x256xf32>
    %cst_16 = arith.constant dense<0.000000e+00> : vector<16x256xf32>
    %16 = tpu.matmul %4, %15, %cst_16 {dimension_numbers = #tpu.dot_dimension_numbers<[1], [0], [0], [1], [0, 0, 1, 1], [], []>} : vector<16x256xf32>, vector<256x256xf32>, vector<16x256xf32> -> vector<16x256xf32>
    %c0_17 = arith.constant 0 : index
    %c0_18 = arith.constant 0 : index
    %17 = vector.load %arg8[%c0_17, %c0_18] : memref<1x256xf32, #tpu.memory_space<vmem>>, vector<1x256xf32>
    %18 = vector.broadcast %17 : vector<1x256xf32> to vector<16x256xf32>
    %19 = arith.addf %16, %18 : vector<16x256xf32>
    %cst_19 = arith.constant dense<0.000000e+00> : vector<16x16xf32>
    %20 = tpu.matmul %9, %14, %cst_19 {dimension_numbers = #tpu.dot_dimension_numbers<[1], [1], [0], [0], [0, 0, 1, 0], [], []>} : vector<16x256xf32>, vector<16x256xf32>, vector<16x16xf32> -> vector<16x16xf32>
    %cst_20 = arith.constant dense<0xFF800000> : vector<16xf32>
    %21 = vector.multi_reduction <maximumf>, %20, %cst_20 [1] : vector<16x16xf32> to vector<16xf32>
    %22 = vector.shape_cast %21 : vector<16xf32> to vector<16x1xf32>
    %23 = vector.broadcast %22 : vector<16x1xf32> to vector<16x16xf32>
    %24 = arith.subf %20, %23 : vector<16x16xf32>
    %25 = math.exp %24 : vector<16x16xf32>
    %cst_21 = arith.constant dense<0.000000e+00> : vector<16xf32>
    %26 = vector.multi_reduction <add>, %25, %cst_21 [1] : vector<16x16xf32> to vector<16xf32>
    %27 = vector.shape_cast %26 : vector<16xf32> to vector<16x1xf32>
    %28 = tpu.reciprocal %27 : vector<16x1xf32> -> vector<16x1xf32>
    %29 = vector.broadcast %28 : vector<16x1xf32> to vector<16x16xf32>
    %30 = arith.mulf %25, %29 : vector<16x16xf32>
    %cst_22 = arith.constant dense<0.000000e+00> : vector<16x256xf32>
    %31 = tpu.matmul %30, %19, %cst_22 {dimension_numbers = #tpu.dot_dimension_numbers<[1], [0], [0], [1], [0, 0, 1, 1], [], []>} : vector<16x16xf32>, vector<16x256xf32>, vector<16x256xf32> -> vector<16x256xf32>
    %c0_23 = arith.constant 0 : index
    %c0_24 = arith.constant 0 : index
    %32 = vector.load %arg9[%c0_23, %c0_24] : memref<1x1xf32, #tpu.memory_space<vmem>>, vector<1x1xf32>
    %33 = vector.broadcast %32 : vector<1x1xf32> to vector<16x256xf32>
    %34 = arith.mulf %33, %31 : vector<16x256xf32>
    %35 = arith.addf %34, %4 : vector<16x256xf32>
    %c0_25 = arith.constant 0 : index
    %c0_26 = arith.constant 0 : index
    %36 = vector.load %arg10[%c0_25, %c0_26] : memref<256x128xf32, #tpu.memory_space<vmem>>, vector<256x128xf32>
    %cst_27 = arith.constant dense<0.000000e+00> : vector<16x128xf32>
    %37 = tpu.matmul %35, %36, %cst_27 {dimension_numbers = #tpu.dot_dimension_numbers<[1], [0], [0], [1], [0, 0, 1, 1], [], []>} : vector<16x256xf32>, vector<256x128xf32>, vector<16x128xf32> -> vector<16x128xf32>
    %c0_28 = arith.constant 0 : index
    %c0_29 = arith.constant 0 : index
    %38 = vector.load %arg11[%c0_28, %c0_29] : memref<1x128xf32, #tpu.memory_space<vmem>>, vector<1x128xf32>
    %39 = vector.broadcast %38 : vector<1x128xf32> to vector<16x128xf32>
    %40 = arith.addf %37, %39 : vector<16x128xf32>
    %cst_30 = arith.constant 0.000000e+00 : f32
    %41 = vector.broadcast %cst_30 : f32 to vector<16x128xf32>
    %42 = arith.maximumf %40, %41 : vector<16x128xf32>
    %c0_31 = arith.constant 0 : index
    %c0_32 = arith.constant 0 : index
    %43 = vector.load %arg12[%c0_31, %c0_32] : memref<128x128xf32, #tpu.memory_space<vmem>>, vector<128x128xf32>
    %cst_33 = arith.constant dense<0.000000e+00> : vector<16x128xf32>
    %44 = tpu.matmul %42, %43, %cst_33 {dimension_numbers = #tpu.dot_dimension_numbers<[1], [0], [0], [1], [0, 0, 1, 1], [], []>} : vector<16x128xf32>, vector<128x128xf32>, vector<16x128xf32> -> vector<16x128xf32>
    %c0_34 = arith.constant 0 : index
    %c0_35 = arith.constant 0 : index
    %45 = vector.load %arg13[%c0_34, %c0_35] : memref<1x128xf32, #tpu.memory_space<vmem>>, vector<1x128xf32>
    %46 = vector.broadcast %45 : vector<1x128xf32> to vector<16x128xf32>
    %47 = arith.addf %44, %46 : vector<16x128xf32>
    %cst_36 = arith.constant 0.000000e+00 : f32
    %48 = vector.broadcast %cst_36 : f32 to vector<16x128xf32>
    %49 = arith.maximumf %47, %48 : vector<16x128xf32>
    %c0_37 = arith.constant 0 : index
    %c0_38 = arith.constant 0 : index
    %50 = vector.load %arg14[%c0_37, %c0_38] : memref<128x256xf32, #tpu.memory_space<vmem>>, vector<128x256xf32>
    %cst_39 = arith.constant dense<0.000000e+00> : vector<16x256xf32>
    %51 = tpu.matmul %49, %50, %cst_39 {dimension_numbers = #tpu.dot_dimension_numbers<[1], [0], [0], [1], [0, 0, 1, 1], [], []>} : vector<16x128xf32>, vector<128x256xf32>, vector<16x256xf32> -> vector<16x256xf32>
    %c0_40 = arith.constant 0 : index
    %c0_41 = arith.constant 0 : index
    %52 = vector.load %arg15[%c0_40, %c0_41] : memref<1x256xf32, #tpu.memory_space<vmem>>, vector<1x256xf32>
    %53 = vector.broadcast %52 : vector<1x256xf32> to vector<16x256xf32>
    %54 = arith.addf %51, %53 : vector<16x256xf32>
    %55 = arith.addf %54, %35 : vector<16x256xf32>
    %c0_42 = arith.constant 0 : index
    %c0_43 = arith.constant 0 : index
    %c0_44 = arith.constant 0 : index
    %56 = vector.load %arg16[%c0_42, %c0_43, %c0_44] : memref<1x16x256xf32, #tpu.memory_space<vmem>>, vector<1x16x256xf32>
    %57 = vector.shape_cast %56 : vector<1x16x256xf32> to vector<16x256xf32>
    %58 = vector.shape_cast %55 : vector<16x256xf32> to vector<1x16x256xf32>
    tpu.vector_store %arg16[%c0_42, %c0_43, %c0_44], %58 {strides = array<i32>} : memref<1x16x256xf32, #tpu.memory_space<vmem>>, vector<1x16x256xf32>,
    return
  }
  func.func @transform_0(%arg0: i32) -> (i32, i32, i32) {
    %c0_i32 = arith.constant 0 : i32
    %c0_i32_0 = arith.constant 0 : i32
    %c0_i32_1 = arith.constant 0 : i32
    return %arg0, %c0_i32, %c0_i32_0 : i32, i32, i32
  }
  func.func @transform_1(%arg0: i32) -> (i32, i32, i32) {
    %c0_i32 = arith.constant 0 : i32
    %c0_i32_0 = arith.constant 0 : i32
    %c0_i32_1 = arith.constant 0 : i32
    %c0_i32_2 = arith.constant 0 : i32
    return %c0_i32, %c0_i32_0, %c0_i32_1 : i32, i32, i32
  }
  func.func @transform_2(%arg0: i32) -> (i32, i32) {
    %c0_i32 = arith.constant 0 : i32
    %c0_i32_0 = arith.constant 0 : i32
    %c0_i32_1 = arith.constant 0 : i32
    return %c0_i32, %c0_i32_0 : i32, i32
  }
  func.func @transform_3(%arg0: i32) -> (i32, i32) {
    %c0_i32 = arith.constant 0 : i32
    %c0_i32_0 = arith.constant 0 : i32
    %c0_i32_1 = arith.constant 0 : i32
    return %c0_i32, %c0_i32_0 : i32, i32
  }
  func.func @transform_4(%arg0: i32) -> (i32, i32) {
    %c0_i32 = arith.constant 0 : i32
    %c0_i32_0 = arith.constant 0 : i32
    %c0_i32_1 = arith.constant 0 : i32
    return %c0_i32, %c0_i32_0 : i32, i32
  }
  func.func @transform_5(%arg0: i32) -> (i32, i32) {
    %c0_i32 = arith.constant 0 : i32
    %c0_i32_0 = arith.constant 0 : i32
    %c0_i32_1 = arith.constant 0 : i32
    return %c0_i32, %c0_i32_0 : i32, i32
  }
  func.func @transform_6(%arg0: i32) -> (i32, i32) {
    %c0_i32 = arith.constant 0 : i32
    %c0_i32_0 = arith.constant 0 : i32
    %c0_i32_1 = arith.constant 0 : i32
    return %c0_i32, %c0_i32_0 : i32, i32
  }
  func.func @transform_7(%arg0: i32) -> (i32, i32) {
    %c0_i32 = arith.constant 0 : i32
    %c0_i32_0 = arith.constant 0 : i32
    %c0_i32_1 = arith.constant 0 : i32
    return %c0_i32, %c0_i32_0 : i32, i32
  }
  func.func @transform_8(%arg0: i32) -> (i32, i32) {
    %c0_i32 = arith.constant 0 : i32
    %c0_i32_0 = arith.constant 0 : i32
    %c0_i32_1 = arith.constant 0 : i32
    return %c0_i32, %c0_i32_0 : i32, i32
  }
  func.func @transform_9(%arg0: i32) -> (i32, i32) {
    %c0_i32 = arith.constant 0 : i32
    %c0_i32_0 = arith.constant 0 : i32
    %c0_i32_1 = arith.constant 0 : i32
    return %c0_i32, %c0_i32_0 : i32, i32
  }
  func.func @transform_10(%arg0: i32) -> (i32, i32) {
    %c0_i32 = arith.constant 0 : i32
    %c0_i32_0 = arith.constant 0 : i32
    %c0_i32_1 = arith.constant 0 : i32
    return %c0_i32, %c0_i32_0 : i32, i32
  }
  func.func @transform_11(%arg0: i32) -> (i32, i32) {
    %c0_i32 = arith.constant 0 : i32
    %c0_i32_0 = arith.constant 0 : i32
    %c0_i32_1 = arith.constant 0 : i32
    return %c0_i32, %c0_i32_0 : i32, i32
  }
  func.func @transform_12(%arg0: i32) -> (i32, i32) {
    %c0_i32 = arith.constant 0 : i32
    %c0_i32_0 = arith.constant 0 : i32
    %c0_i32_1 = arith.constant 0 : i32
    return %c0_i32, %c0_i32_0 : i32, i32
  }
  func.func @transform_13(%arg0: i32) -> (i32, i32) {
    %c0_i32 = arith.constant 0 : i32
    %c0_i32_0 = arith.constant 0 : i32
    %c0_i32_1 = arith.constant 0 : i32
    return %c0_i32, %c0_i32_0 : i32, i32
  }
  func.func @transform_14(%arg0: i32) -> (i32, i32) {
    %c0_i32 = arith.constant 0 : i32
    %c0_i32_0 = arith.constant 0 : i32
    %c0_i32_1 = arith.constant 0 : i32
    return %c0_i32, %c0_i32_0 : i32, i32
  }
  func.func @transform_15(%arg0: i32) -> (i32, i32, i32) {
    %c0_i32 = arith.constant 0 : i32
    %c0_i32_0 = arith.constant 0 : i32
    %c0_i32_1 = arith.constant 0 : i32
    return %arg0, %c0_i32, %c0_i32_0 : i32, i32, i32
  }
}

</mosaic_0001>

<llo_original>
// kernel: _lambda_.1
$region0: #{_lambda_.1}
  #allocation0 [shape = 'u32[]', space=smem, size = 0x4, offset = 0x4, fixed_abs, tag = 'smem constant byte address 0x4 - core index']
  #allocation1 [shape = 'u32[144,128]{1,0:T(1,128)}', space=vmem, size = 0x12000, scoped, tag = 'internal scratch']
  #allocation2 [shape = 'f32[1,1]{1,0:T(1,128)S(1)}', space=vmem, size = 0x200, scoped, tag = 'scoped memory for _lambda_.1']
  %s0 = inlined_call_operand.hbm [shape: f32[2,16,256], index: 0, kind: input, shape index: {}]
  %s1 = inlined_call_operand.hbm [shape: f32[1,16,256], index: 1, kind: input, shape index: {}]
  %s2 = inlined_call_operand.hbm [shape: f32[256,256], index: 2, kind: input, shape index: {}]
  %s3 = inlined_call_operand.hbm [shape: f32[1,256], index: 3, kind: input, shape index: {}]
  %s4 = inlined_call_operand.hbm [shape: f32[256,256], index: 4, kind: input, shape index: {}]
  %s5 = inlined_call_operand.vmem [shape: f32[1,256], index: 5, kind: input, shape index: {}]
  %s6 = inlined_call_operand.hbm [shape: f32[256,256], index: 6, kind: input, shape index: {}]
  %s7 = inlined_call_operand.vmem [shape: f32[1,256], index: 7, kind: input, shape index: {}]
  %s8 = inlined_call_operand.<no memory space> [shape: f32[1,1], index: 8, kind: input, shape index: {}]
  %s9 = inlined_call_operand.hbm [shape: f32[256,128], index: 9, kind: input, shape index: {}]
  %s10 = inlined_call_operand.vmem [shape: f32[1,128], index: 10, kind: input, shape index: {}]
  %s11 = inlined_call_operand.hbm [shape: f32[128,128], index: 11, kind: input, shape index: {}]
  %s12 = inlined_call_operand.vmem [shape: f32[1,128], index: 12, kind: input, shape index: {}]
  %s13 = inlined_call_operand.hbm [shape: f32[128,256], index: 13, kind: input, shape index: {}]
  %s14 = inlined_call_operand.vmem [shape: f32[1,256], index: 14, kind: input, shape index: {}]
  %s15 = inlined_call_operand.hbm [shape: f32[2,16,256], index: 15, kind: output, shape index: {}]
  %s16 = sld [smem:[#allocation0]]
  $region129: #{_lambda_.1} parent=0
    _
  %s18 = ssub.s32 1, %s16
  %s19 = scalar_select 0, %s18, %s16
  %v20 = vstv %s8
  %21 = vst [vmem:[#allocation2] sm:$0x1] %v20
  $region1: #{_lambda_.1} parent=0
    #allocation3 [shape = 'u8[32768]{0}', space=vmem, size = 0x8000, scoped, tag = 'input window, operand 0']
    #allocation4 [shape = 's32[2]{0}', space=sflag, size = 0x8, scoped, tag = 'scoped memory for _lambda_.1']
    #allocation5 [shape = 's32[2]{0}', space=sflag, size = 0x8, scoped, tag = 'scoped memory for _lambda_.1']
    #allocation6 [shape = 'u8[16384]{0}', space=vmem, size = 0x4000, scoped, tag = 'input window, operand 1, single buffered']
    #allocation7 [shape = 's32[1]{0}', space=sflag, size = 0x4, scoped, tag = 'scoped memory for _lambda_.1']
    #allocation8 [shape = 'u8[262144]{0}', space=vmem, size = 0x40000, scoped, tag = 'input window, operand 2, single buffered']
    #allocation9 [shape = 'u8[1024]{0}', space=vmem, size = 0x400, scoped, tag = 'input window, operand 3, single buffered']
    #allocation10 [shape = 's32[1]{0}', space=sflag, size = 0x4, scoped, tag = 'scoped memory for _lambda_.1']
    #allocation11 [shape = 'u8[262144]{0}', space=vmem, size = 0x40000, scoped, tag = 'input window, operand 4, single buffered']
    #allocation12 [shape = 'u8[262144]{0}', space=vmem, size = 0x40000, scoped, tag = 'input window, operand 6, single buffered']
    #allocation13 [shape = 's32[1]{0}', space=sflag, size = 0x4, scoped, tag = 'scoped memory for _lambda_.1']
    #allocation14 [shape = 'u8[131072]{0}', space=vmem, size = 0x20000, scoped, tag = 'input window, operand 9, single buffered']
    #allocation15 [shape = 'u8[65536]{0}', space=vmem, size = 0x10000, scoped, tag = 'input window, operand 11, single buffered']
    #allocation16 [shape = 's32[1]{0}', space=sflag, size = 0x4, scoped, tag = 'scoped memory for _lambda_.1']
    #allocation17 [shape = 'u8[131072]{0}', space=vmem, size = 0x20000, scoped, tag = 'input window, operand 13, single buffered']
    #allocation18 [shape = 'u8[32768]{0}', space=vmem, size = 0x8000, scoped, tag = 'output window, operand 0']
    %22 = vsyncpa [#allocation4], 0
    %s23 = scalar_lea.sflag [#allocation4], 1
    %24 = vsyncpa %s23, 0
    %25 = vsyncpa [#allocation7], 0
    %26 = vsyncpa [#allocation10], 0
    %27 = vsyncpa [#allocation13], 0
    %28 = vsyncpa [#allocation16], 0
    %29 = vsyncpa [#allocation5], 0
    %s30 = scalar_lea.sflag [#allocation5], 1
    %31 = vsyncpa %s30, 0
    loop: start=0, step=1, limit=4
    $region2: #{_lambda_.1} parent=1 // loop_pre_header
      _
    $region3: #{_lambda_.1} parent=1 // loop_header
      %s33 = sphi 0, %s37
      %p34 = scmp.ge.s32.totalorder %s33, 4
      %s43 = sphi 0, %s45
      %s46 = sphi 0, %s43
      %s47 = sphi 0, %s46
      %s63 = sphi 0, %s47
      %s67 = sphi 0, %s67
      %s69 = sphi 0, %s67
      %s70 = sphi 0, %s69
      %s84 = sphi 0, %s70
      %s88 = sphi 0, %s88
      %s90 = sphi 0, %s88
      %s91 = sphi 0, %s90
      %s105 = sphi 0, %s91
      %s109 = sphi 0, %s109
      %s111 = sphi 0, %s109
      %s112 = sphi 0, %s111
      %s126 = sphi 0, %s112
      %s130 = sphi 0, %s130
      %s132 = sphi 0, %s130
      %s133 = sphi 0, %s132
      %s147 = sphi 0, %s133
      %s151 = sphi 0, %s151
      %s153 = sphi 0, %s151
      %s154 = sphi 0, %s153
      %s168 = sphi 0, %s154
      %s172 = sphi 0, %s172
      %s174 = sphi 0, %s172
      %s175 = sphi 0, %s174
      %s189 = sphi 0, %s175
      %s193 = sphi 0, %s193
      %s195 = sphi 0, %s193
      %s196 = sphi 0, %s195
      %s210 = sphi 0, %s196
      %s214 = sphi 0, %s214
      %s216 = sphi 0, %s214
      %s217 = sphi 0, %s216
      %s231 = sphi 0, %s217
      %s235 = sphi 0, %s235
      %s237 = sphi 0, %s235
      %s238 = sphi 0, %s237
      %s252 = sphi 0, %s238
      %s256 = sphi 0, %s256
      %s258 = sphi 0, %s256
      %s259 = sphi 0, %s258
      %s273 = sphi 0, %s259
      %s277 = sphi 0, %s277
      %s279 = sphi 0, %s277
      %s280 = sphi 0, %s279
      %s294 = sphi 0, %s280
      %s298 = sphi 0, %s298
      %s300 = sphi 0, %s298
      %s301 = sphi 0, %s300
      %s315 = sphi 0, %s301
      %s319 = sphi 0, %s319
      %s321 = sphi 0, %s319
      %s322 = sphi 0, %s321
      %s336 = sphi 0, %s322
      %s340 = sphi 0, %s340
      %s342 = sphi 0, %s340
      %s343 = sphi 0, %s342
      %s357 = sphi 0, %s343
      %s363 = sphi 0, %s365
      %s366 = sphi 0, %s363
      %s367 = sphi 0, %s366
      %s383 = sphi 0, %s367
    $region4: #{_lambda_.1} parent=1 // loop_header_branch
      %36 = sbr.rel (%p34) target = $region8
    $region5: #{_lambda_.1} parent=1 // loop_body
      %s38 = ssub.s32 %s33, 1
      %s39 = ssub.s32 %s33, 2
      %s40 = sadd.s32 %s33, 1
      %s41 = ssub.s32 %s33, %s40
      %p42 = scmp.eq.s32.totalorder %s41, 0
      %s44 = sadd.s32 %s43, 1
      %s45 = scalar_select %p42, %s43, %s44
      %p48 = pneg %p42
      %p49 = scmp.eq.s32.totalorder %s33, 1
      %p50 = por %p48, %p49
      %p51 = scmp.ne.s32.totalorder %s43, %s46
      %p52 = scmp.eq.s32.totalorder %s33, 0
      %p53 = por %p51, %p52
      %p54 = scmp.ne.s32.totalorder %s43, %s46
      %p55 = scmp.eq.s32.totalorder %s38, 1
      %p56 = por %p54, %p55
      %p57 = scmp.ne.s32.totalorder %s46, %s47
      %p58 = scmp.eq.s32.totalorder %s38, 0
      %p59 = por %p57, %p58
      %p60 = scmp.ne.s32.totalorder %s46, %s47
      %p61 = scmp.eq.s32.totalorder %s39, 1
      %p62 = por %p60, %p61
      %p64 = scmp.ne.s32.totalorder %s47, %s63
      %p65 = scmp.eq.s32.totalorder %s39, 0
      %p66 = por %p64, %p65
      %s68 = sadd.s32 %s67, 1
      %p71 = scmp.eq.s32.totalorder %s33, 1
      %p72 = scmp.ne.s32.totalorder %s67, %s69
      %p73 = scmp.eq.s32.totalorder %s33, 0
      %p74 = por %p72, %p73
      %p75 = scmp.ne.s32.totalorder %s67, %s69
      %p76 = scmp.eq.s32.totalorder %s38, 1
      %p77 = por %p75, %p76
      %p78 = scmp.ne.s32.totalorder %s69, %s70
      %p79 = scmp.eq.s32.totalorder %s38, 0
      %p80 = por %p78, %p79
      %p81 = scmp.ne.s32.totalorder %s69, %s70
      %p82 = scmp.eq.s32.totalorder %s39, 1
      %p83 = por %p81, %p82
      %p85 = scmp.ne.s32.totalorder %s70, %s84
      %p86 = scmp.eq.s32.totalorder %s39, 0
      %p87 = por %p85, %p86
      %s89 = sadd.s32 %s88, 1
      %p92 = scmp.eq.s32.totalorder %s33, 1
      %p93 = scmp.ne.s32.totalorder %s88, %s90
      %p94 = scmp.eq.s32.totalorder %s33, 0
      %p95 = por %p93, %p94
      %p96 = scmp.ne.s32.totalorder %s88, %s90
      %p97 = scmp.eq.s32.totalorder %s38, 1
      %p98 = por %p96, %p97
      %p99 = scmp.ne.s32.totalorder %s90, %s91
      %p100 = scmp.eq.s32.totalorder %s38, 0
      %p101 = por %p99, %p100
      %p102 = scmp.ne.s32.totalorder %s90, %s91
      %p103 = scmp.eq.s32.totalorder %s39, 1
      %p104 = por %p102, %p103
      %p106 = scmp.ne.s32.totalorder %s91, %s105
      %p107 = scmp.eq.s32.totalorder %s39, 0
      %p108 = por %p106, %p107
      %s110 = sadd.s32 %s109, 1
      %p113 = scmp.eq.s32.totalorder %s33, 1
      %p114 = scmp.ne.s32.totalorder %s109, %s111
      %p115 = scmp.eq.s32.totalorder %s33, 0
      %p116 = por %p114, %p115
      %p117 = scmp.ne.s32.totalorder %s109, %s111
      %p118 = scmp.eq.s32.totalorder %s38, 1
      %p119 = por %p117, %p118
      %p120 = scmp.ne.s32.totalorder %s111, %s112
      %p121 = scmp.eq.s32.totalorder %s38, 0
      %p122 = por %p120, %p121
      %p123 = scmp.ne.s32.totalorder %s111, %s112
      %p124 = scmp.eq.s32.totalorder %s39, 1
      %p125 = por %p123, %p124
      %p127 = scmp.ne.s32.totalorder %s112, %s126
      %p128 = scmp.eq.s32.totalorder %s39, 0
      %p129 = por %p127, %p128
      %s131 = sadd.s32 %s130, 1
      %p134 = scmp.eq.s32.totalorder %s33, 1
      %p135 = scmp.ne.s32.totalorder %s130, %s132
      %p136 = scmp.eq.s32.totalorder %s33, 0
      %p137 = por %p135, %p136
      %p138 = scmp.ne.s32.totalorder %s130, %s132
      %p139 = scmp.eq.s32.totalorder %s38, 1
      %p140 = por %p138, %p139
      %p141 = scmp.ne.s32.totalorder %s132, %s133
      %p142 = scmp.eq.s32.totalorder %s38, 0
      %p143 = por %p141, %p142
      %p144 = scmp.ne.s32.totalorder %s132, %s133
      %p145 = scmp.eq.s32.totalorder %s39, 1
      %p146 = por %p144, %p145
      %p148 = scmp.ne.s32.totalorder %s133, %s147
      %p149 = scmp.eq.s32.totalorder %s39, 0
      %p150 = por %p148, %p149
      %s152 = sadd.s32 %s151, 1
      %p155 = scmp.eq.s32.totalorder %s33, 1
      %p156 = scmp.ne.s32.totalorder %s151, %s153
      %p157 = scmp.eq.s32.totalorder %s33, 0
      %p158 = por %p156, %p157
      %p159 = scmp.ne.s32.totalorder %s151, %s153
      %p160 = scmp.eq.s32.totalorder %s38, 1
      %p161 = por %p159, %p160
      %p162 = scmp.ne.s32.totalorder %s153, %s154
      %p163 = scmp.eq.s32.totalorder %s38, 0
      %p164 = por %p162, %p163
      %p165 = scmp.ne.s32.totalorder %s153, %s154
      %p166 = scmp.eq.s32.totalorder %s39, 1
      %p167 = por %p165, %p166
      %p169 = scmp.ne.s32.totalorder %s154, %s168
      %p170 = scmp.eq.s32.totalorder %s39, 0
      %p171 = por %p169, %p170
      %s173 = sadd.s32 %s172, 1
      %p176 = scmp.eq.s32.totalorder %s33, 1
      %p177 = scmp.ne.s32.totalorder %s172, %s174
      %p178 = scmp.eq.s32.totalorder %s33, 0
      %p179 = por %p177, %p178
      %p180 = scmp.ne.s32.totalorder %s172, %s174
      %p181 = scmp.eq.s32.totalorder %s38, 1
      %p182 = por %p180, %p181
      %p183 = scmp.ne.s32.totalorder %s174, %s175
      %p184 = scmp.eq.s32.totalorder %s38, 0
      %p185 = por %p183, %p184
      %p186 = scmp.ne.s32.totalorder %s174, %s175
      %p187 = scmp.eq.s32.totalorder %s39, 1
      %p188 = por %p186, %p187
      %p190 = scmp.ne.s32.totalorder %s175, %s189
      %p191 = scmp.eq.s32.totalorder %s39, 0
      %p192 = por %p190, %p191
      %s194 = sadd.s32 %s193, 1
      %p197 = scmp.eq.s32.totalorder %s33, 1
      %p198 = scmp.ne.s32.totalorder %s193, %s195
      %p199 = scmp.eq.s32.totalorder %s33, 0
      %p200 = por %p198, %p199
      %p201 = scmp.ne.s32.totalorder %s193, %s195
      %p202 = scmp.eq.s32.totalorder %s38, 1
      %p203 = por %p201, %p202
      %p204 = scmp.ne.s32.totalorder %s195, %s196
      %p205 = scmp.eq.s32.totalorder %s38, 0
      %p206 = por %p204, %p205
      %p207 = scmp.ne.s32.totalorder %s195, %s196
      %p208 = scmp.eq.s32.totalorder %s39, 1
      %p209 = por %p207, %p208
      %p211 = scmp.ne.s32.totalorder %s196, %s210
      %p212 = scmp.eq.s32.totalorder %s39, 0
      %p213 = por %p211, %p212
      %s215 = sadd.s32 %s214, 1
      %p218 = scmp.eq.s32.totalorder %s33, 1
      %p219 = scmp.ne.s32.totalorder %s214, %s216
      %p220 = scmp.eq.s32.totalorder %s33, 0
      %p221 = por %p219, %p220
      %p222 = scmp.ne.s32.totalorder %s214, %s216
      %p223 = scmp.eq.s32.totalorder %s38, 1
      %p224 = por %p222, %p223
      %p225 = scmp.ne.s32.totalorder %s216, %s217
      %p226 = scmp.eq.s32.totalorder %s38, 0
      %p227 = por %p225, %p226
      %p228 = scmp.ne.s32.totalorder %s216, %s217
      %p229 = scmp.eq.s32.totalorder %s39, 1
      %p230 = por %p228, %p229
      %p232 = scmp.ne.s32.totalorder %s217, %s231
      %p233 = scmp.eq.s32.totalorder %s39, 0
      %p234 = por %p232, %p233
      %s236 = sadd.s32 %s235, 1
      %p239 = scmp.eq.s32.totalorder %s33, 1
      %p240 = scmp.ne.s32.totalorder %s235, %s237
      %p241 = scmp.eq.s32.totalorder %s33, 0
      %p242 = por %p240, %p241
      %p243 = scmp.ne.s32.totalorder %s235, %s237
      %p244 = scmp.eq.s32.totalorder %s38, 1
      %p245 = por %p243, %p244
      %p246 = scmp.ne.s32.totalorder %s237, %s238
      %p247 = scmp.eq.s32.totalorder %s38, 0
      %p248 = por %p246, %p247
      %p249 = scmp.ne.s32.totalorder %s237, %s238
      %p250 = scmp.eq.s32.totalorder %s39, 1
      %p251 = por %p249, %p250
      %p253 = scmp.ne.s32.totalorder %s238, %s252
      %p254 = scmp.eq.s32.totalorder %s39, 0
      %p255 = por %p253, %p254
      %s257 = sadd.s32 %s256, 1
      %p260 = scmp.eq.s32.totalorder %s33, 1
      %p261 = scmp.ne.s32.totalorder %s256, %s258
      %p262 = scmp.eq.s32.totalorder %s33, 0
      %p263 = por %p261, %p262
      %p264 = scmp.ne.s32.totalorder %s256, %s258
      %p265 = scmp.eq.s32.totalorder %s38, 1
      %p266 = por %p264, %p265
      %p267 = scmp.ne.s32.totalorder %s258, %s259
      %p268 = scmp.eq.s32.totalorder %s38, 0
      %p269 = por %p267, %p268
      %p270 = scmp.ne.s32.totalorder %s258, %s259
      %p271 = scmp.eq.s32.totalorder %s39, 1
      %p272 = por %p270, %p271
      %p274 = scmp.ne.s32.totalorder %s259, %s273
      %p275 = scmp.eq.s32.totalorder %s39, 0
      %p276 = por %p274, %p275
      %s278 = sadd.s32 %s277, 1
      %p281 = scmp.eq.s32.totalorder %s33, 1
      %p282 = scmp.ne.s32.totalorder %s277, %s279
      %p283 = scmp.eq.s32.totalorder %s33, 0
      %p284 = por %p282, %p283
      %p285 = scmp.ne.s32.totalorder %s277, %s279
      %p286 = scmp.eq.s32.totalorder %s38, 1
      %p287 = por %p285, %p286
      %p288 = scmp.ne.s32.totalorder %s279, %s280
      %p289 = scmp.eq.s32.totalorder %s38, 0
      %p290 = por %p288, %p289
      %p291 = scmp.ne.s32.totalorder %s279, %s280
      %p292 = scmp.eq.s32.totalorder %s39, 1
      %p293 = por %p291, %p292
      %p295 = scmp.ne.s32.totalorder %s280, %s294
      %p296 = scmp.eq.s32.totalorder %s39, 0
      %p297 = por %p295, %p296
      %s299 = sadd.s32 %s298, 1
      %p302 = scmp.eq.s32.totalorder %s33, 1
      %p303 = scmp.ne.s32.totalorder %s298, %s300
      %p304 = scmp.eq.s32.totalorder %s33, 0
      %p305 = por %p303, %p304
      %p306 = scmp.ne.s32.totalorder %s298, %s300
      %p307 = scmp.eq.s32.totalorder %s38, 1
      %p308 = por %p306, %p307
      %p309 = scmp.ne.s32.totalorder %s300, %s301
      %p310 = scmp.eq.s32.totalorder %s38, 0
      %p311 = por %p309, %p310
      %p312 = scmp.ne.s32.totalorder %s300, %s301
      %p313 = scmp.eq.s32.totalorder %s39, 1
      %p314 = por %p312, %p313
      %p316 = scmp.ne.s32.totalorder %s301, %s315
      %p317 = scmp.eq.s32.totalorder %s39, 0
      %p318 = por %p316, %p317
      %s320 = sadd.s32 %s319, 1
      %p323 = scmp.eq.s32.totalorder %s33, 1
      %p324 = scmp.ne.s32.totalorder %s319, %s321
      %p325 = scmp.eq.s32.totalorder %s33, 0
      %p326 = por %p324, %p325
      %p327 = scmp.ne.s32.totalorder %s319, %s321
      %p328 = scmp.eq.s32.totalorder %s38, 1
      %p329 = por %p327, %p328
      %p330 = scmp.ne.s32.totalorder %s321, %s322
      %p331 = scmp.eq.s32.totalorder %s38, 0
      %p332 = por %p330, %p331
      %p333 = scmp.ne.s32.totalorder %s321, %s322
      %p334 = scmp.eq.s32.totalorder %s39, 1
      %p335 = por %p333, %p334
      %p337 = scmp.ne.s32.totalorder %s322, %s336
      %p338 = scmp.eq.s32.totalorder %s39, 0
      %p339 = por %p337, %p338
      %s341 = sadd.s32 %s340, 1
      %p344 = scmp.eq.s32.totalorder %s33, 1
      %p345 = scmp.ne.s32.totalorder %s340, %s342
      %p346 = scmp.eq.s32.totalorder %s33, 0
      %p347 = por %p345, %p346
      %p348 = scmp.ne.s32.totalorder %s340, %s342
      %p349 = scmp.eq.s32.totalorder %s38, 1
      %p350 = por %p348, %p349
      %p351 = scmp.ne.s32.totalorder %s342, %s343
      %p352 = scmp.eq.s32.totalorder %s38, 0
      %p353 = por %p351, %p352
      %p354 = scmp.ne.s32.totalorder %s342, %s343
      %p355 = scmp.eq.s32.totalorder %s39, 1
      %p356 = por %p354, %p355
      %p358 = scmp.ne.s32.totalorder %s343, %s357
      %p359 = scmp.eq.s32.totalorder %s39, 0
      %p360 = por %p358, %p359
      %s361 = ssub.s32 %s33, %s40
      %p362 = scmp.eq.s32.totalorder %s361, 0
      %s364 = sadd.s32 %s363, 1
      %s365 = scalar_select %p362, %s363, %s364
      %p368 = pneg %p362
      %p369 = scmp.eq.s32.totalorder %s33, 1
      %p370 = por %p368, %p369
      %p371 = scmp.ne.s32.totalorder %s363, %s366
      %p372 = scmp.eq.s32.totalorder %s33, 0
      %p373 = por %p371, %p372
      %p374 = scmp.ne.s32.totalorder %s363, %s366
      %p375 = scmp.eq.s32.totalorder %s38, 1
      %p376 = por %p374, %p375
      %p377 = scmp.ne.s32.totalorder %s366, %s367
      %p378 = scmp.eq.s32.totalorder %s38, 0
      %p379 = por %p377, %p378
      %p380 = scmp.ne.s32.totalorder %s366, %s367
      %p381 = scmp.eq.s32.totalorder %s39, 1
      %p382 = por %p380, %p381
      %p384 = scmp.ne.s32.totalorder %s367, %s383
      %p385 = scmp.eq.s32.totalorder %s39, 0
      %p386 = por %p384, %p385
      %p387 = scmp.le.s32.totalorder 1, %s33
      %p388 = scmp.lt.s32.totalorder %s33, 3
      %p389 = pnand %p387, %p388
      %p390 = pneg %p389
      // Predicated region
      $region9: #{_lambda_.1} parent=5 // pred_check
        _
      $region10: #{_lambda_.1} parent=5 // pred_check_branch
        %392 = sbr.rel (%p389) target = $region12
      $region11: #{_lambda_.1} parent=5 // pred_region
        %s393 = ssub.s32 %s33, 1
        // Predicated region
        $region13: #{_lambda_.1} parent=11 // pred_check
          %p394 = pneg %p80
        $region14: #{_lambda_.1} parent=11 // pred_check_branch
          %396 = sbr.rel (%p394) target = $region16
        $region15: #{_lambda_.1} parent=11 // pred_region
          %s398 = ssub.s32 512, 512
          %399 = vsyncadd [#allocation7], %s398
          %s400 = sshll.u32 [#allocation6], 4
          %s401 = int_to_ptr.vmem [resolvable:$true] %s400
          %406 = dma.hbm_to_vmem [thread:$0]  %s1, 512, %s401, [#allocation7], 256, 256, 16
        $region16: #{_lambda_.1} parent=11 // pred_fallthru
          _
        // Predicated region
        $region17: #{_lambda_.1} parent=11 // pred_check
          %p407 = pneg %p101
        $region18: #{_lambda_.1} parent=11 // pred_check_branch
          %409 = sbr.rel (%p407) target = $region20
        $region19: #{_lambda_.1} parent=11 // pred_region
          %s411 = ssub.s32 8192, 8192
          %412 = vsyncadd [#allocation7], %s411
          %s413 = sshll.u32 [#allocation8], 4
          %s414 = int_to_ptr.vmem [resolvable:$true] %s413
          %419 = dma.hbm_to_vmem [thread:$0]  %s2, 8192, %s414, [#allocation7], 256, 256, 16
        $region20: #{_lambda_.1} parent=11 // pred_fallthru
          _
        // Predicated region
        $region21: #{_lambda_.1} parent=11 // pred_check
          %p420 = pneg %p122
        $region22: #{_lambda_.1} parent=11 // pred_check_branch
          %422 = sbr.rel (%p420) target = $region24
        $region23: #{_lambda_.1} parent=11 // pred_region
          %s424 = ssub.s32 32, 32
          %425 = vsyncadd [#allocation10], %s424
          %s427 = sshll.u32 [#allocation9], 4
          %s428 = int_to_ptr.vmem [resolvable:$true] %s427
          %430 = dma.hbm_to_vmem [thread:$0]  %s3, 32, %s428, [#allocation10]
        $region24: #{_lambda_.1} parent=11 // pred_fallthru
          _
        // Predicated region
        $region25: #{_lambda_.1} parent=11 // pred_check
          %p431 = pneg %p143
        $region26: #{_lambda_.1} parent=11 // pred_check_branch
          %433 = sbr.rel (%p431) target = $region28
        $region27: #{_lambda_.1} parent=11 // pred_region
          %s435 = ssub.s32 8192, 8192
          %436 = vsyncadd [#allocation10], %s435
          %s437 = sshll.u32 [#allocation11], 4
          %s438 = int_to_ptr.vmem [resolvable:$true] %s437
          %443 = dma.hbm_to_vmem [thread:$0]  %s4, 8192, %s438, [#allocation10], 256, 256, 16
        $region28: #{_lambda_.1} parent=11 // pred_fallthru
          _
        // Predicated region
        $region29: #{_lambda_.1} parent=11 // pred_check
          %p444 = pneg %p164
        $region30: #{_lambda_.1} parent=11 // pred_check_branch
          %446 = sbr.rel (%p444) target = $region32
        $region31: #{_lambda_.1} parent=11 // pred_region
          _
        $region32: #{_lambda_.1} parent=11 // pred_fallthru
          _
        // Predicated region
        $region33: #{_lambda_.1} parent=11 // pred_check
          %p447 = pneg %p185
        $region34: #{_lambda_.1} parent=11 // pred_check_branch
          %449 = sbr.rel (%p447) target = $region36
        $region35: #{_lambda_.1} parent=11 // pred_region
          %s451 = ssub.s32 8192, 8192
          %452 = vsyncadd [#allocation13], %s451
          %s453 = sshll.u32 [#allocation12], 4
          %s454 = int_to_ptr.vmem [resolvable:$true] %s453
          %459 = dma.hbm_to_vmem [thread:$0]  %s6, 8192, %s454, [#allocation13], 256, 256, 16
        $region36: #{_lambda_.1} parent=11 // pred_fallthru
          _
        // Predicated region
        $region37: #{_lambda_.1} parent=11 // pred_check
          %p460 = pneg %p206
        $region38: #{_lambda_.1} parent=11 // pred_check_branch
          %462 = sbr.rel (%p460) target = $region40
        $region39: #{_lambda_.1} parent=11 // pred_region
          _
        $region40: #{_lambda_.1} parent=11 // pred_fallthru
          _
        // Predicated region
        $region41: #{_lambda_.1} parent=11 // pred_check
          %p463 = pneg %p227
        $region42: #{_lambda_.1} parent=11 // pred_check_branch
          %465 = sbr.rel (%p463) target = $region44
        $region43: #{_lambda_.1} parent=11 // pred_region
          _
        $region44: #{_lambda_.1} parent=11 // pred_fallthru
          _
        // Predicated region
        $region45: #{_lambda_.1} parent=11 // pred_check
          %p466 = pneg %p248
        $region46: #{_lambda_.1} parent=11 // pred_check_branch
          %468 = sbr.rel (%p466) target = $region48
        $region47: #{_lambda_.1} parent=11 // pred_region
          %s470 = ssub.s32 4096, 4096
          %471 = vsyncadd [#allocation13], %s470
          %s472 = sshll.u32 [#allocation14], 4
          %s473 = int_to_ptr.vmem [resolvable:$true] %s472
          %478 = dma.hbm_to_vmem [thread:$0]  %s9, 4096, %s473, [#allocation13], 128, 128, 8
        $region48: #{_lambda_.1} parent=11 // pred_fallthru
          _
        // Predicated region
        $region49: #{_lambda_.1} parent=11 // pred_check
          %p479 = pneg %p269
        $region50: #{_lambda_.1} parent=11 // pred_check_branch
          %481 = sbr.rel (%p479) target = $region52
        $region51: #{_lambda_.1} parent=11 // pred_region
          _
        $region52: #{_lambda_.1} parent=11 // pred_fallthru
          _
        // Predicated region
        $region53: #{_lambda_.1} parent=11 // pred_check
          %p482 = pneg %p290
        $region54: #{_lambda_.1} parent=11 // pred_check_branch
          %484 = sbr.rel (%p482) target = $region56
        $region55: #{_lambda_.1} parent=11 // pred_region
          %s486 = ssub.s32 2048, 2048
          %487 = vsyncadd [#allocation16], %s486
          %s488 = sshll.u32 [#allocation15], 4
          %s489 = int_to_ptr.vmem [resolvable:$true] %s488
          %494 = dma.hbm_to_vmem [thread:$0]  %s11, 2048, %s489, [#allocation16], 128, 128, 8
        $region56: #{_lambda_.1} parent=11 // pred_fallthru
          _
        // Predicated region
        $region57: #{_lambda_.1} parent=11 // pred_check
          %p495 = pneg %p311
        $region58: #{_lambda_.1} parent=11 // pred_check_branch
          %497 = sbr.rel (%p495) target = $region60
        $region59: #{_lambda_.1} parent=11 // pred_region
          _
        $region60: #{_lambda_.1} parent=11 // pred_fallthru
          _
        // Predicated region
        $region61: #{_lambda_.1} parent=11 // pred_check
          %p498 = pneg %p332
        $region62: #{_lambda_.1} parent=11 // pred_check_branch
          %500 = sbr.rel (%p498) target = $region64
        $region63: #{_lambda_.1} parent=11 // pred_region
          %s502 = ssub.s32 4096, 4096
          %503 = vsyncadd [#allocation16], %s502
          %s504 = sshll.u32 [#allocation17], 4
          %s505 = int_to_ptr.vmem [resolvable:$true] %s504
          %510 = dma.hbm_to_vmem [thread:$0]  %s13, 4096, %s505, [#allocation16], 256, 256, 16
        $region64: #{_lambda_.1} parent=11 // pred_fallthru
          _
        // Predicated region
        $region65: #{_lambda_.1} parent=11 // pred_check
          %p511 = pneg %p353
        $region66: #{_lambda_.1} parent=11 // pred_check_branch
          %513 = sbr.rel (%p511) target = $region68
        $region67: #{_lambda_.1} parent=11 // pred_region
          _
        $region68: #{_lambda_.1} parent=11 // pred_fallthru
          _
      $region12: #{_lambda_.1} parent=5 // pred_fallthru
        _
      %p514 = scmp.lt.s32.totalorder %s33, 2
      // Predicated region
      $region69: #{_lambda_.1} parent=5 // pred_check
        %p515 = pneg %p514
      $region70: #{_lambda_.1} parent=5 // pred_check_branch
        %517 = sbr.rel (%p515) target = $region72
      $region71: #{_lambda_.1} parent=5 // pred_region
        // Predicated region
        $region73: #{_lambda_.1} parent=71 // pred_check
          %p518 = pneg %p53
        $region74: #{_lambda_.1} parent=71 // pred_check_branch
          %520 = sbr.rel (%p518) target = $region76
        $region75: #{_lambda_.1} parent=71 // pred_region
          %s521 = sand.u32 %s43, 1
          %s522 = scalar_lea.sflag [#allocation4], %s521
          %s523 = sand.u32 %s43, 1
          %s524 = smul.addr %s523, 32
          %s525 = scalar_lea.vmem [#allocation3], %s524
          %s527 = ssub.s32 512, 512
          %528 = vsyncadd %s522, %s527
          %s529 = smul.addr %s33, 4
          %s530 = smul.addr %s529, 128
          %s531 = scalar_lea.hbm %s0, %s530
          %s532 = sshll.u32 %s525, 4
          %s533 = int_to_ptr.vmem [resolvable:$true] %s532
          %538 = dma.hbm_to_vmem [thread:$0]  %s531, 512, %s533, %s522, 256, 256, 16
        $region76: #{_lambda_.1} parent=71 // pred_fallthru
          _
      $region72: #{_lambda_.1} parent=5 // pred_fallthru
        _
      %p539 = scmp.le.s32.totalorder 1, %s33
      %p540 = scmp.lt.s32.totalorder %s33, 3
      %p541 = pnand %p539, %p540
      %p542 = pneg %p541
      // Predicated region
      $region77: #{_lambda_.1} parent=5 // pred_check
        _
      $region78: #{_lambda_.1} parent=5 // pred_check_branch
        %544 = sbr.rel (%p541) target = $region80
      $region79: #{_lambda_.1} parent=5 // pred_region
        %s545 = ssub.s32 %s33, 1
        %s546 = sand.u32 %s46, 1
        %s547 = scalar_lea.sflag [#allocation4], %s546
        %s548 = sand.u32 %s46, 1
        %s549 = smul.addr %s548, 32
        %s550 = scalar_lea.vmem [#allocation3], %s549
        // Predicated region
        $region81: #{_lambda_.1} parent=79 // pred_check
          %p551 = pneg %p59
        $region82: #{_lambda_.1} parent=79 // pred_check_branch
          %553 = sbr.rel (%p551) target = $region84
        $region83: #{_lambda_.1} parent=79 // pred_region
          %554 = dma.done %s547, 512
        $region84: #{_lambda_.1} parent=79 // pred_fallthru
          _
        // Predicated region
        $region85: #{_lambda_.1} parent=79 // pred_check
          %p555 = pneg %p80
        $region86: #{_lambda_.1} parent=79 // pred_check_branch
          %557 = sbr.rel (%p555) target = $region88
        $region87: #{_lambda_.1} parent=79 // pred_region
          %558 = dma.done [#allocation7], 512
        $region88: #{_lambda_.1} parent=79 // pred_fallthru
          _
        // Predicated region
        $region89: #{_lambda_.1} parent=79 // pred_check
          %p559 = pneg %p101
        $region90: #{_lambda_.1} parent=79 // pred_check_branch
          %561 = sbr.rel (%p559) target = $region92
        $region91: #{_lambda_.1} parent=79 // pred_region
          %562 = dma.done [#allocation7], 8192
        $region92: #{_lambda_.1} parent=79 // pred_fallthru
          _
        // Predicated region
        $region93: #{_lambda_.1} parent=79 // pred_check
          %p563 = pneg %p122
        $region94: #{_lambda_.1} parent=79 // pred_check_branch
          %565 = sbr.rel (%p563) target = $region96
        $region95: #{_lambda_.1} parent=79 // pred_region
          %566 = dma.done [#allocation10], 32
        $region96: #{_lambda_.1} parent=79 // pred_fallthru
          _
        // Predicated region
        $region97: #{_lambda_.1} parent=79 // pred_check
          %p567 = pneg %p143
        $region98: #{_lambda_.1} parent=79 // pred_check_branch
          %569 = sbr.rel (%p567) target = $region100
        $region99: #{_lambda_.1} parent=79 // pred_region
          %570 = dma.done [#allocation10], 8192
        $region100: #{_lambda_.1} parent=79 // pred_fallthru
          _
        // Predicated region
        $region101: #{_lambda_.1} parent=79 // pred_check
          %p571 = pneg %p185
        $region102: #{_lambda_.1} parent=79 // pred_check_branch
          %573 = sbr.rel (%p571) target = $region104
        $region103: #{_lambda_.1} parent=79 // pred_region
          %574 = dma.done [#allocation13], 8192
        $region104: #{_lambda_.1} parent=79 // pred_fallthru
          _
        // Predicated region
        $region105: #{_lambda_.1} parent=79 // pred_check
          %p575 = pneg %p248
        $region106: #{_lambda_.1} parent=79 // pred_check_branch
          %577 = sbr.rel (%p575) target = $region108
        $region107: #{_lambda_.1} parent=79 // pred_region
          %578 = dma.done [#allocation13], 4096
        $region108: #{_lambda_.1} parent=79 // pred_fallthru
          _
        // Predicated region
        $region109: #{_lambda_.1} parent=79 // pred_check
          %p579 = pneg %p290
        $region110: #{_lambda_.1} parent=79 // pred_check_branch
          %581 = sbr.rel (%p579) target = $region112
        $region111: #{_lambda_.1} parent=79 // pred_region
          %582 = dma.done [#allocation16], 2048
        $region112: #{_lambda_.1} parent=79 // pred_fallthru
          _
        // Predicated region
        $region113: #{_lambda_.1} parent=79 // pred_check
          %p583 = pneg %p332
        $region114: #{_lambda_.1} parent=79 // pred_check_branch
          %585 = sbr.rel (%p583) target = $region116
        $region115: #{_lambda_.1} parent=79 // pred_region
          %586 = dma.done [#allocation16], 4096
        $region116: #{_lambda_.1} parent=79 // pred_fallthru
          _
        %s587 = sand.u32 %s46, 1
        %s588 = scalar_lea.sflag [#allocation4], %s587
        %s589 = sand.u32 %s46, 1
        %s590 = smul.addr %s589, 32
        %s591 = scalar_lea.vmem [#allocation3], %s590
        %p592 = pneg %p59
        %p593 = pneg %p56
        %p594 = pneg %p80
        %p595 = pneg %p77
        %p596 = pneg %p101
        %p597 = pneg %p98
        %p598 = pneg %p122
        %p599 = pneg %p119
        %p600 = pneg %p143
        %p601 = pneg %p140
        %p602 = pneg %p164
        %p603 = pneg %p161
        %p604 = pneg %p185
        %p605 = pneg %p182
        %p606 = pneg %p206
        %p607 = pneg %p203
        %p608 = pneg %p227
        %p609 = pneg %p224
        %p610 = pneg %p248
        %p611 = pneg %p245
        %p612 = pneg %p269
        %p613 = pneg %p266
        %p614 = pneg %p290
        %p615 = pneg %p287
        %p616 = pneg %p311
        %p617 = pneg %p308
        %p618 = pneg %p332
        %p619 = pneg %p329
        %p620 = pneg %p353
        %p621 = pneg %p350
        %p622 = pneg %p379
        %p623 = pneg %p376
        %s624 = sand.u32 %s366, 1
        %s625 = scalar_lea.sflag [#allocation5], %s624
        %s626 = sand.u32 %s366, 1
        %s627 = smul.addr %s626, 32
        %s628 = scalar_lea.vmem [#allocation18], %s627
        %v629 = vld [vmem:[%s550] sm:$0xff]
        %v630 = vld [vmem:[%s550 + $0x8] sm:$0xff]
        %v631 = vld [vmem:[%s550 + $0x10] sm:$0xff]
        %v632 = vld [vmem:[%s550 + $0x18] sm:$0xff]
        %v633 = vld [vmem:[#allocation6] sm:$0xff]
        %v634 = vld [vmem:[#allocation6 + $0x8] sm:$0xff]
        %v635 = vld [vmem:[#allocation6 + $0x10] sm:$0xff]
        %v636 = vld [vmem:[#allocation6 + $0x18] sm:$0xff]
        %v637 = vadd.f32 %v629, %v633
        %v638 = vadd.f32 %v630, %v634
        %v639 = vadd.f32 %v631, %v635
        %v640 = vadd.f32 %v632, %v636
        %v641 = vld [vmem:[#allocation8] sm:$0xff]
        %v642 = vld [vmem:[#allocation8 + $0x8] sm:$0xff]
        %v643 = vld [vmem:[#allocation8 + $0x10] sm:$0xff]
        %v644 = vld [vmem:[#allocation8 + $0x18] sm:$0xff]
        %v645 = vld [vmem:[#allocation8 + $0x20] sm:$0xff]
        %v646 = vld [vmem:[#allocation8 + $0x28] sm:$0xff]
        %v647 = vld [vmem:[#allocation8 + $0x30] sm:$0xff]
        %v648 = vld [vmem:[#allocation8 + $0x38] sm:$0xff]
        %v649 = vld [vmem:[#allocation8 + $0x40] sm:$0xff]
        %v650 = vld [vmem:[#allocation8 + $0x48] sm:$0xff]
        %v651 = vld [vmem:[#allocation8 + $0x50] sm:$0xff]
        %v652 = vld [vmem:[#allocation8 + $0x58] sm:$0xff]
        %v653 = vld [vmem:[#allocation8 + $0x60] sm:$0xff]
        %v654 = vld [vmem:[#allocation8 + $0x68] sm:$0xff]
        %v655 = vld [vmem:[#allocation8 + $0x70] sm:$0xff]
        %v656 = vld [vmem:[#allocation8 + $0x78] sm:$0xff]
        %v657 = vld [vmem:[#allocation8 + $0x80] sm:$0xff]
        %v658 = vld [vmem:[#allocation8 + $0x88] sm:$0xff]
        %v659 = vld [vmem:[#allocation8 + $0x90] sm:$0xff]
        %v660 = vld [vmem:[#allocation8 + $0x98] sm:$0xff]
        %v661 = vld [vmem:[#allocation8 + $0xa0] sm:$0xff]
        %v662 = vld [vmem:[#allocation8 + $0xa8] sm:$0xff]
        %v663 = vld [vmem:[#allocation8 + $0xb0] sm:$0xff]
        %v664 = vld [vmem:[#allocation8 + $0xb8] sm:$0xff]
        %v665 = vld [vmem:[#allocation8 + $0xc0] sm:$0xff]
        %v666 = vld [vmem:[#allocation8 + $0xc8] sm:$0xff]
        %v667 = vld [vmem:[#allocation8 + $0xd0] sm:$0xff]
        %v668 = vld [vmem:[#allocation8 + $0xd8] sm:$0xff]
        %v669 = vld [vmem:[#allocation8 + $0xe0] sm:$0xff]
        %v670 = vld [vmem:[#allocation8 + $0xe8] sm:$0xff]
        %v671 = vld [vmem:[#allocation8 + $0xf0] sm:$0xff]
        %v672 = vld [vmem:[#allocation8 + $0xf8] sm:$0xff]
        %v673 = vld [vmem:[#allocation8 + $0x100] sm:$0xff]
        %v674 = vld [vmem:[#allocation8 + $0x108] sm:$0xff]
        %v675 = vld [vmem:[#allocation8 + $0x110] sm:$0xff]
        %v676 = vld [vmem:[#allocation8 + $0x118] sm:$0xff]
        %v677 = vld [vmem:[#allocation8 + $0x120] sm:$0xff]
        %v678 = vld [vmem:[#allocation8 + $0x128] sm:$0xff]
        %v679 = vld [vmem:[#allocation8 + $0x130] sm:$0xff]
        %v680 = vld [vmem:[#allocation8 + $0x138] sm:$0xff]
        %v681 = vld [vmem:[#allocation8 + $0x140] sm:$0xff]
        %v682 = vld [vmem:[#allocation8 + $0x148] sm:$0xff]
        %v683 = vld [vmem:[#allocation8 + $0x150] sm:$0xff]
        %v684 = vld [vmem:[#allocation8 + $0x158] sm:$0xff]
        %v685 = vld [vmem:[#allocation8 + $0x160] sm:$0xff]
        %v686 = vld [vmem:[#allocation8 + $0x168] sm:$0xff]
        %v687 = vld [vmem:[#allocation8 + $0x170] sm:$0xff]
        %v688 = vld [vmem:[#allocation8 + $0x178] sm:$0xff]
        %v689 = vld [vmem:[#allocation8 + $0x180] sm:$0xff]
        %v690 = vld [vmem:[#allocation8 + $0x188] sm:$0xff]
        %v691 = vld [vmem:[#allocation8 + $0x190] sm:$0xff]
        %v692 = vld [vmem:[#allocation8 + $0x198] sm:$0xff]
        %v693 = vld [vmem:[#allocation8 + $0x1a0] sm:$0xff]
        %v694 = vld [vmem:[#allocation8 + $0x1a8] sm:$0xff]
        %v695 = vld [vmem:[#allocation8 + $0x1b0] sm:$0xff]
        %v696 = vld [vmem:[#allocation8 + $0x1b8] sm:$0xff]
        %v697 = vld [vmem:[#allocation8 + $0x1c0] sm:$0xff]
        %v698 = vld [vmem:[#allocation8 + $0x1c8] sm:$0xff]
        %v699 = vld [vmem:[#allocation8 + $0x1d0] sm:$0xff]
        %v700 = vld [vmem:[#allocation8 + $0x1d8] sm:$0xff]
        %v701 = vld [vmem:[#allocation8 + $0x1e0] sm:$0xff]
        %v702 = vld [vmem:[#allocation8 + $0x1e8] sm:$0xff]
        %v703 = vld [vmem:[#allocation8 + $0x1f0] sm:$0xff]
        %v704 = vld [vmem:[#allocation8 + $0x1f8] sm:$0xff]
        %v705 = vld [vmem:[#allocation9] sm:$0x3]
        %v707 = vlaneseq
        %v708 = vshrl.u32 %v707, 7
        %v709 = vsub.s32 0, %v708
        %v710 = vrot.slane %v705, %v709
        %v711 = vlaneseq
        %v712 = vshrl.u32 %v711, 7
        %v713 = vsub.s32 1, %v712
        %v714 = vrot.slane %v705, %v713
        %717 = vmatprep.subr.mxu0 %v672
        %718 = vmatpush1.msra.mxu0 %v671
        %719 = vmatprep.subr.mxu0 %v670
        %720 = vmatpush1.msra.mxu0 %v669
        %721 = vmatprep.subr.mxu0 %v668
        %722 = vmatpush1.msra.mxu0 %v667
        %723 = vmatprep.subr.mxu0 %v666
        %724 = vmatpush1.msra.mxu0 %v665
        %725 = vmatprep.subr.mxu0 %v664
        %726 = vmatpush1.msra.mxu0 %v663
        %727 = vmatprep.subr.mxu0 %v662
        %728 = vmatpush1.msra.mxu0 %v661
        %729 = vmatprep.subr.mxu0 %v660
        %730 = vmatpush1.msra.mxu0 %v659
        %731 = vmatprep.subr.mxu0 %v658
        %732 = vmatpush1.msra.mxu0 %v657
        %733 = vmatprep.subr.mxu0 %v656
        %734 = vmatpush1.msra.mxu0 %v655
        %735 = vmatprep.subr.mxu0 %v654
        %736 = vmatpush1.msra.mxu0 %v653
        %737 = vmatprep.subr.mxu0 %v652
        %738 = vmatpush1.msra.mxu0 %v651
        %739 = vmatprep.subr.mxu0 %v650
        %740 = vmatpush1.msra.mxu0 %v649
        %741 = vmatprep.subr.mxu0 %v648
        %742 = vmatpush1.msra.mxu0 %v647
        %743 = vmatprep.subr.mxu0 %v646
        %744 = vmatpush1.msra.mxu0 %v645
        %745 = vmatprep.subr.mxu0 %v644
        %746 = vmatpush1.msra.mxu0 %v643
        %747 = vmatprep.subr.mxu0 %v642
        %748 = vmatpush1.msra.mxu0 %v641
        %749 = vmatprep.subr.mxu0 %v704
        %750 = vmatpush2.msra.mxu0 %v703
        %751 = vmatprep.subr.mxu0 %v702
        %752 = vmatpush2.msra.mxu0 %v701
        %753 = vmatprep.subr.mxu0 %v700
        %754 = vmatpush2.msra.mxu0 %v699
        %755 = vmatprep.subr.mxu0 %v698
        %756 = vmatpush2.msra.mxu0 %v697
        %757 = vmatprep.subr.mxu0 %v696
        %758 = vmatpush2.msra.mxu0 %v695
        %759 = vmatprep.subr.mxu0 %v694
        %760 = vmatpush2.msra.mxu0 %v693
        %761 = vmatprep.subr.mxu0 %v692
        %762 = vmatpush2.msra.mxu0 %v691
        %763 = vmatprep.subr.mxu0 %v690
        %764 = vmatpush2.msra.mxu0 %v689
        %765 = vmatprep.subr.mxu0 %v688
        %766 = vmatpush2.msra.mxu0 %v687
        %767 = vmatprep.subr.mxu0 %v686
        %768 = vmatpush2.msra.mxu0 %v685
        %769 = vmatprep.subr.mxu0 %v684
        %770 = vmatpush2.msra.mxu0 %v683
        %771 = vmatprep.subr.mxu0 %v682
        %772 = vmatpush2.msra.mxu0 %v681
        %773 = vmatprep.subr.mxu0 %v680
        %774 = vmatpush2.msra.mxu0 %v679
        %775 = vmatprep.subr.mxu0 %v678
        %776 = vmatpush2.msra.mxu0 %v677
        %777 = vmatprep.subr.mxu0 %v676
        %778 = vmatpush2.msra.mxu0 %v675
        %779 = vmatprep.subr.mxu0 %v674
        %780 = vmatpush2.msra.mxu0 %v673
        %781 = vmatprep.mubr.f32.mxu0 %v638
        %782 = vmatmul.mubr.f32.gmra.mxu0 %v637
        %v783 = vpop.f32.mrf.mxu0
        %v784 = vadd.f32 %v710, %v783
        %v785 = vpop.f32.mrf.mxu0
        %v786 = vadd.f32 %v714, %v785
        %787 = vmatprep.mubr.f32.mxu0 %v640
        %788 = vmatmul.mubr.f32.gmra.mxu0 %v639
        %v789 = vpop.f32.mrf.mxu0
        %v790 = vadd.f32 %v710, %v789
        %v791 = vpop.f32.mrf.mxu0
        %v792 = vadd.f32 %v714, %v791
        %793 = vdwg.mxu0
        %v794 = vld [vmem:[#allocation11] sm:$0xff]
        %v795 = vld [vmem:[#allocation11 + $0x8] sm:$0xff]
        %v796 = vld [vmem:[#allocation11 + $0x10] sm:$0xff]
        %v797 = vld [vmem:[#allocation11 + $0x18] sm:$0xff]
        %v798 = vld [vmem:[#allocation11 + $0x20] sm:$0xff]
        %v799 = vld [vmem:[#allocation11 + $0x28] sm:$0xff]
        %v800 = vld [vmem:[#allocation11 + $0x30] sm:$0xff]
        %v801 = vld [vmem:[#allocation11 + $0x38] sm:$0xff]
        %v802 = vld [vmem:[#allocation11 + $0x40] sm:$0xff]
        %v803 = vld [vmem:[#allocation11 + $0x48] sm:$0xff]
        %v804 = vld [vmem:[#allocation11 + $0x50] sm:$0xff]
        %v805 = vld [vmem:[#allocation11 + $0x58] sm:$0xff]
        %v806 = vld [vmem:[#allocation11 + $0x60] sm:$0xff]
        %v807 = vld [vmem:[#allocation11 + $0x68] sm:$0xff]
        %v808 = vld [vmem:[#allocation11 + $0x70] sm:$0xff]
        %v809 = vld [vmem:[#allocation11 + $0x78] sm:$0xff]
        %v810 = vld [vmem:[#allocation11 + $0x80] sm:$0xff]
        %v811 = vld [vmem:[#allocation11 + $0x88] sm:$0xff]
        %v812 = vld [vmem:[#allocation11 + $0x90] sm:$0xff]
        %v813 = vld [vmem:[#allocation11 + $0x98] sm:$0xff]
        %v814 = vld [vmem:[#allocation11 + $0xa0] sm:$0xff]
        %v815 = vld [vmem:[#allocation11 + $0xa8] sm:$0xff]
        %v816 = vld [vmem:[#allocation11 + $0xb0] sm:$0xff]
        %v817 = vld [vmem:[#allocation11 + $0xb8] sm:$0xff]
        %v818 = vld [vmem:[#allocation11 + $0xc0] sm:$0xff]
        %v819 = vld [vmem:[#allocation11 + $0xc8] sm:$0xff]
        %v820 = vld [vmem:[#allocation11 + $0xd0] sm:$0xff]
        %v821 = vld [vmem:[#allocation11 + $0xd8] sm:$0xff]
        %v822 = vld [vmem:[#allocation11 + $0xe0] sm:$0xff]
        %v823 = vld [vmem:[#allocation11 + $0xe8] sm:$0xff]
        %v824 = vld [vmem:[#allocation11 + $0xf0] sm:$0xff]
        %v825 = vld [vmem:[#allocation11 + $0xf8] sm:$0xff]
        %v826 = vld [vmem:[#allocation11 + $0x100] sm:$0xff]
        %v827 = vld [vmem:[#allocation11 + $0x108] sm:$0xff]
        %v828 = vld [vmem:[#allocation11 + $0x110] sm:$0xff]
        %v829 = vld [vmem:[#allocation11 + $0x118] sm:$0xff]
        %v830 = vld [vmem:[#allocation11 + $0x120] sm:$0xff]
        %v831 = vld [vmem:[#allocation11 + $0x128] sm:$0xff]
        %v832 = vld [vmem:[#allocation11 + $0x130] sm:$0xff]
        %v833 = vld [vmem:[#allocation11 + $0x138] sm:$0xff]
        %v834 = vld [vmem:[#allocation11 + $0x140] sm:$0xff]
        %v835 = vld [vmem:[#allocation11 + $0x148] sm:$0xff]
        %v836 = vld [vmem:[#allocation11 + $0x150] sm:$0xff]
        %v837 = vld [vmem:[#allocation11 + $0x158] sm:$0xff]
        %v838 = vld [vmem:[#allocation11 + $0x160] sm:$0xff]
        %v839 = vld [vmem:[#allocation11 + $0x168] sm:$0xff]
        %v840 = vld [vmem:[#allocation11 + $0x170] sm:$0xff]
        %v841 = vld [vmem:[#allocation11 + $0x178] sm:$0xff]
        %v842 = vld [vmem:[#allocation11 + $0x180] sm:$0xff]
        %v843 = vld [vmem:[#allocation11 + $0x188] sm:$0xff]
        %v844 = vld [vmem:[#allocation11 + $0x190] sm:$0xff]
        %v845 = vld [vmem:[#allocation11 + $0x198] sm:$0xff]
        %v846 = vld [vmem:[#allocation11 + $0x1a0] sm:$0xff]
        %v847 = vld [vmem:[#allocation11 + $0x1a8] sm:$0xff]
        %v848 = vld [vmem:[#allocation11 + $0x1b0] sm:$0xff]
        %v849 = vld [vmem:[#allocation11 + $0x1b8] sm:$0xff]
        %v850 = vld [vmem:[#allocation11 + $0x1c0] sm:$0xff]
        %v851 = vld [vmem:[#allocation11 + $0x1c8] sm:$0xff]
        %v852 = vld [vmem:[#allocation11 + $0x1d0] sm:$0xff]
        %v853 = vld [vmem:[#allocation11 + $0x1d8] sm:$0xff]
        %v854 = vld [vmem:[#allocation11 + $0x1e0] sm:$0xff]
        %v855 = vld [vmem:[#allocation11 + $0x1e8] sm:$0xff]
        %v856 = vld [vmem:[#allocation11 + $0x1f0] sm:$0xff]
        %v857 = vld [vmem:[#allocation11 + $0x1f8] sm:$0xff]
        %v858 = vld [vmem:[%s5] sm:$0x3]
        %v860 = vlaneseq
        %v861 = vshrl.u32 %v860, 7
        %v862 = vsub.s32 0, %v861
        %v863 = vrot.slane %v858, %v862
        %v864 = vlaneseq
        %v865 = vshrl.u32 %v864, 7
        %v866 = vsub.s32 1, %v865
        %v867 = vrot.slane %v858, %v866
        %870 = vmatprep.subr.mxu0 %v825
        %871 = vmatpush1.msra.mxu0 %v824
        %872 = vmatprep.subr.mxu0 %v823
        %873 = vmatpush1.msra.mxu0 %v822
        %874 = vmatprep.subr.mxu0 %v821
        %875 = vmatpush1.msra.mxu0 %v820
        %876 = vmatprep.subr.mxu0 %v819
        %877 = vmatpush1.msra.mxu0 %v818
        %878 = vmatprep.subr.mxu0 %v817
        %879 = vmatpush1.msra.mxu0 %v816
        %880 = vmatprep.subr.mxu0 %v815
        %881 = vmatpush1.msra.mxu0 %v814
        %882 = vmatprep.subr.mxu0 %v813
        %883 = vmatpush1.msra.mxu0 %v812
        %884 = vmatprep.subr.mxu0 %v811
        %885 = vmatpush1.msra.mxu0 %v810
        %886 = vmatprep.subr.mxu0 %v809
        %887 = vmatpush1.msra.mxu0 %v808
        %888 = vmatprep.subr.mxu0 %v807
        %889 = vmatpush1.msra.mxu0 %v806
        %890 = vmatprep.subr.mxu0 %v805
        %891 = vmatpush1.msra.mxu0 %v804
        %892 = vmatprep.subr.mxu0 %v803
        %893 = vmatpush1.msra.mxu0 %v802
        %894 = vmatprep.subr.mxu0 %v801
        %895 = vmatpush1.msra.mxu0 %v800
        %896 = vmatprep.subr.mxu0 %v799
        %897 = vmatpush1.msra.mxu0 %v798
        %898 = vmatprep.subr.mxu0 %v797
        %899 = vmatpush1.msra.mxu0 %v796
        %900 = vmatprep.subr.mxu0 %v795
        %901 = vmatpush1.msra.mxu0 %v794
        %902 = vmatprep.subr.mxu0 %v857
        %903 = vmatpush2.msra.mxu0 %v856
        %904 = vmatprep.subr.mxu0 %v855
        %905 = vmatpush2.msra.mxu0 %v854
        %906 = vmatprep.subr.mxu0 %v853
        %907 = vmatpush2.msra.mxu0 %v852
        %908 = vmatprep.subr.mxu0 %v851
        %909 = vmatpush2.msra.mxu0 %v850
        %910 = vmatprep.subr.mxu0 %v849
        %911 = vmatpush2.msra.mxu0 %v848
        %912 = vmatprep.subr.mxu0 %v847
        %913 = vmatpush2.msra.mxu0 %v846
        %914 = vmatprep.subr.mxu0 %v845
        %915 = vmatpush2.msra.mxu0 %v844
        %916 = vmatprep.subr.mxu0 %v843
        %917 = vmatpush2.msra.mxu0 %v842
        %918 = vmatprep.subr.mxu0 %v841
        %919 = vmatpush2.msra.mxu0 %v840
        %920 = vmatprep.subr.mxu0 %v839
        %921 = vmatpush2.msra.mxu0 %v838
        %922 = vmatprep.subr.mxu0 %v837
        %923 = vmatpush2.msra.mxu0 %v836
        %924 = vmatprep.subr.mxu0 %v835
        %925 = vmatpush2.msra.mxu0 %v834
        %926 = vmatprep.subr.mxu0 %v833
        %927 = vmatpush2.msra.mxu0 %v832
        %928 = vmatprep.subr.mxu0 %v831
        %929 = vmatpush2.msra.mxu0 %v830
        %930 = vmatprep.subr.mxu0 %v829
        %931 = vmatpush2.msra.mxu0 %v828
        %932 = vmatprep.subr.mxu0 %v827
        %933 = vmatpush2.msra.mxu0 %v826
        %934 = vmatprep.mubr.f32.mxu0 %v638
        %935 = vmatmul.mubr.f32.gmra.mxu0 %v637
        %v936 = vpop.f32.mrf.mxu0
        %v937 = vadd.f32 %v863, %v936
        %v938 = vpop.f32.mrf.mxu0
        %v939 = vadd.f32 %v867, %v938
        %940 = vmatprep.mubr.f32.mxu0 %v640
        %941 = vmatmul.mubr.f32.gmra.mxu0 %v639
        %v942 = vpop.f32.mrf.mxu0
        %v943 = vadd.f32 %v863, %v942
        %v944 = vpop.f32.mrf.mxu0
        %v945 = vadd.f32 %v867, %v944
        %946 = vdwg.mxu0
        %v947 = vld [vmem:[#allocation12] sm:$0xff]
        %v948 = vld [vmem:[#allocation12 + $0x8] sm:$0xff]
        %v949 = vld [vmem:[#allocation12 + $0x10] sm:$0xff]
        %v950 = vld [vmem:[#allocation12 + $0x18] sm:$0xff]
        %v951 = vld [vmem:[#allocation12 + $0x20] sm:$0xff]
        %v952 = vld [vmem:[#allocation12 + $0x28] sm:$0xff]
        %v953 = vld [vmem:[#allocation12 + $0x30] sm:$0xff]
        %v954 = vld [vmem:[#allocation12 + $0x38] sm:$0xff]
        %v955 = vld [vmem:[#allocation12 + $0x40] sm:$0xff]
        %v956 = vld [vmem:[#allocation12 + $0x48] sm:$0xff]
        %v957 = vld [vmem:[#allocation12 + $0x50] sm:$0xff]
        %v958 = vld [vmem:[#allocation12 + $0x58] sm:$0xff]
        %v959 = vld [vmem:[#allocation12 + $0x60] sm:$0xff]
        %v960 = vld [vmem:[#allocation12 + $0x68] sm:$0xff]
        %v961 = vld [vmem:[#allocation12 + $0x70] sm:$0xff]
        %v962 = vld [vmem:[#allocation12 + $0x78] sm:$0xff]
        %v963 = vld [vmem:[#allocation12 + $0x80] sm:$0xff]
        %v964 = vld [vmem:[#allocation12 + $0x88] sm:$0xff]
        %v965 = vld [vmem:[#allocation12 + $0x90] sm:$0xff]
        %v966 = vld [vmem:[#allocation12 + $0x98] sm:$0xff]
        %v967 = vld [vmem:[#allocation12 + $0xa0] sm:$0xff]
        %v968 = vld [vmem:[#allocation12 + $0xa8] sm:$0xff]
        %v969 = vld [vmem:[#allocation12 + $0xb0] sm:$0xff]
        %v970 = vld [vmem:[#allocation12 + $0xb8] sm:$0xff]
        %v971 = vld [vmem:[#allocation12 + $0xc0] sm:$0xff]
        %v972 = vld [vmem:[#allocation12 + $0xc8] sm:$0xff]
        %v973 = vld [vmem:[#allocation12 + $0xd0] sm:$0xff]
        %v974 = vld [vmem:[#allocation12 + $0xd8] sm:$0xff]
        %v975 = vld [vmem:[#allocation12 + $0xe0] sm:$0xff]
        %v976 = vld [vmem:[#allocation12 + $0xe8] sm:$0xff]
        %v977 = vld [vmem:[#allocation12 + $0xf0] sm:$0xff]
        %v978 = vld [vmem:[#allocation12 + $0xf8] sm:$0xff]
        %v979 = vld [vmem:[#allocation12 + $0x100] sm:$0xff]
        %v980 = vld [vmem:[#allocation12 + $0x108] sm:$0xff]
        %v981 = vld [vmem:[#allocation12 + $0x110] sm:$0xff]
        %v982 = vld [vmem:[#allocation12 + $0x118] sm:$0xff]
        %v983 = vld [vmem:[#allocation12 + $0x120] sm:$0xff]
        %v984 = vld [vmem:[#allocation12 + $0x128] sm:$0xff]
        %v985 = vld [vmem:[#allocation12 + $0x130] sm:$0xff]
        %v986 = vld [vmem:[#allocation12 + $0x138] sm:$0xff]
        %v987 = vld [vmem:[#allocation12 + $0x140] sm:$0xff]
        %v988 = vld [vmem:[#allocation12 + $0x148] sm:$0xff]
        %v989 = vld [vmem:[#allocation12 + $0x150] sm:$0xff]
        %v990 = vld [vmem:[#allocation12 + $0x158] sm:$0xff]
        %v991 = vld [vmem:[#allocation12 + $0x160] sm:$0xff]
        %v992 = vld [vmem:[#allocation12 + $0x168] sm:$0xff]
        %v993 = vld [vmem:[#allocation12 + $0x170] sm:$0xff]
        %v994 = vld [vmem:[#allocation12 + $0x178] sm:$0xff]
        %v995 = vld [vmem:[#allocation12 + $0x180] sm:$0xff]
        %v996 = vld [vmem:[#allocation12 + $0x188] sm:$0xff]
        %v997 = vld [vmem:[#allocation12 + $0x190] sm:$0xff]
        %v998 = vld [vmem:[#allocation12 + $0x198] sm:$0xff]
        %v999 = vld [vmem:[#allocation12 + $0x1a0] sm:$0xff]
        %v1000 = vld [vmem:[#allocation12 + $0x1a8] sm:$0xff]
        %v1001 = vld [vmem:[#allocation12 + $0x1b0] sm:$0xff]
        %v1002 = vld [vmem:[#allocation12 + $0x1b8] sm:$0xff]
        %v1003 = vld [vmem:[#allocation12 + $0x1c0] sm:$0xff]
        %v1004 = vld [vmem:[#allocation12 + $0x1c8] sm:$0xff]
        %v1005 = vld [vmem:[#allocation12 + $0x1d0] sm:$0xff]
        %v1006 = vld [vmem:[#allocation12 + $0x1d8] sm:$0xff]
        %v1007 = vld [vmem:[#allocation12 + $0x1e0] sm:$0xff]
        %v1008 = vld [vmem:[#allocation12 + $0x1e8] sm:$0xff]
        %v1009 = vld [vmem:[#allocation12 + $0x1f0] sm:$0xff]
        %v1010 = vld [vmem:[#allocation12 + $0x1f8] sm:$0xff]
        %v1011 = vld [vmem:[%s7] sm:$0x3]
        %v1013 = vlaneseq
        %v1014 = vshrl.u32 %v1013, 7
        %v1015 = vsub.s32 0, %v1014
        %v1016 = vrot.slane %v1011, %v1015
        %v1017 = vlaneseq
        %v1018 = vshrl.u32 %v1017, 7
        %v1019 = vsub.s32 1, %v1018
        %v1020 = vrot.slane %v1011, %v1019
        %1023 = vmatprep.subr.mxu0 %v978
        %1024 = vmatpush1.msra.mxu0 %v977
        %1025 = vmatprep.subr.mxu0 %v976
        %1026 = vmatpush1.msra.mxu0 %v975
        %1027 = vmatprep.subr.mxu0 %v974
        %1028 = vmatpush1.msra.mxu0 %v973
        %1029 = vmatprep.subr.mxu0 %v972
        %1030 = vmatpush1.msra.mxu0 %v971
        %1031 = vmatprep.subr.mxu0 %v970
        %1032 = vmatpush1.msra.mxu0 %v969
        %1033 = vmatprep.subr.mxu0 %v968
        %1034 = vmatpush1.msra.mxu0 %v967
        %1035 = vmatprep.subr.mxu0 %v966
        %1036 = vmatpush1.msra.mxu0 %v965
        %1037 = vmatprep.subr.mxu0 %v964
        %1038 = vmatpush1.msra.mxu0 %v963
        %1039 = vmatprep.subr.mxu0 %v962
        %1040 = vmatpush1.msra.mxu0 %v961
        %1041 = vmatprep.subr.mxu0 %v960
        %1042 = vmatpush1.msra.mxu0 %v959
        %1043 = vmatprep.subr.mxu0 %v958
        %1044 = vmatpush1.msra.mxu0 %v957
        %1045 = vmatprep.subr.mxu0 %v956
        %1046 = vmatpush1.msra.mxu0 %v955
        %1047 = vmatprep.subr.mxu0 %v954
        %1048 = vmatpush1.msra.mxu0 %v953
        %1049 = vmatprep.subr.mxu0 %v952
        %1050 = vmatpush1.msra.mxu0 %v951
        %1051 = vmatprep.subr.mxu0 %v950
        %1052 = vmatpush1.msra.mxu0 %v949
        %1053 = vmatprep.subr.mxu0 %v948
        %1054 = vmatpush1.msra.mxu0 %v947
        %1055 = vmatprep.subr.mxu0 %v1010
        %1056 = vmatpush2.msra.mxu0 %v1009
        %1057 = vmatprep.subr.mxu0 %v1008
        %1058 = vmatpush2.msra.mxu0 %v1007
        %1059 = vmatprep.subr.mxu0 %v1006
        %1060 = vmatpush2.msra.mxu0 %v1005
        %1061 = vmatprep.subr.mxu0 %v1004
        %1062 = vmatpush2.msra.mxu0 %v1003
        %1063 = vmatprep.subr.mxu0 %v1002
        %1064 = vmatpush2.msra.mxu0 %v1001
        %1065 = vmatprep.subr.mxu0 %v1000
        %1066 = vmatpush2.msra.mxu0 %v999
        %1067 = vmatprep.subr.mxu0 %v998
        %1068 = vmatpush2.msra.mxu0 %v997
        %1069 = vmatprep.subr.mxu0 %v996
        %1070 = vmatpush2.msra.mxu0 %v995
        %1071 = vmatprep.subr.mxu0 %v994
        %1072 = vmatpush2.msra.mxu0 %v993
        %1073 = vmatprep.subr.mxu0 %v992
        %1074 = vmatpush2.msra.mxu0 %v991
        %1075 = vmatprep.subr.mxu0 %v990
        %1076 = vmatpush2.msra.mxu0 %v989
        %1077 = vmatprep.subr.mxu0 %v988
        %1078 = vmatpush2.msra.mxu0 %v987
        %1079 = vmatprep.subr.mxu0 %v986
        %1080 = vmatpush2.msra.mxu0 %v985
        %1081 = vmatprep.subr.mxu0 %v984
        %1082 = vmatpush2.msra.mxu0 %v983
        %1083 = vmatprep.subr.mxu0 %v982
        %1084 = vmatpush2.msra.mxu0 %v981
        %1085 = vmatprep.subr.mxu0 %v980
        %1086 = vmatpush2.msra.mxu0 %v979
        %1087 = vmatprep.mubr.f32.mxu0 %v638
        %1088 = vmatmul.mubr.f32.gmra.mxu0 %v637
        %v1089 = vpop.f32.mrf.mxu0
        %v1090 = vadd.f32 %v1016, %v1089
        %v1091 = vpop.f32.mrf.mxu0
        %v1092 = vadd.f32 %v1020, %v1091
        %1093 = vmatprep.mubr.f32.mxu0 %v640
        %1094 = vmatmul.mubr.f32.gmra.mxu0 %v639
        %v1095 = vpop.f32.mrf.mxu0
        %v1096 = vadd.f32 %v1016, %v1095
        %v1097 = vpop.f32.mrf.mxu0
        %v1098 = vadd.f32 %v1020, %v1097
        %1099 = vdwg.mxu0
        %1100 = vmatprep.subr.mxu0 0.0
        %1101 = vmatpush1.xpose.msra.mxu0 0.0
        %1102 = vmatprep.subr.mxu0 0.0
        %1103 = vmatpush1.xpose.msra.mxu0 0.0
        %1104 = vmatprep.subr.mxu0 0.0
        %1105 = vmatpush1.xpose.msra.mxu0 0.0
        %1106 = vmatprep.subr.mxu0 0.0
        %1107 = vmatpush1.xpose.msra.mxu0 0.0
        %1108 = vmatprep.subr.mxu0 0.0
        %1109 = vmatpush1.xpose.msra.mxu0 0.0
        %1110 = vmatprep.subr.mxu0 0.0
        %1111 = vmatpush1.xpose.msra.mxu0 0.0
        %1112 = vmatprep.subr.mxu0 0.0
        %1113 = vmatpush1.xpose.msra.mxu0 0.0
        %1114 = vmatprep.subr.mxu0 0.0
        %1115 = vmatpush1.xpose.msra.mxu0 0.0
        %1116 = vmatprep.subr.mxu0 0.0
        %1117 = vmatpush1.xpose.msra.mxu0 0.0
        %1118 = vmatprep.subr.mxu0 0.0
        %1119 = vmatpush1.xpose.msra.mxu0 0.0
        %1120 = vmatprep.subr.mxu0 0.0
        %1121 = vmatpush1.xpose.msra.mxu0 0.0
        %1122 = vmatprep.subr.mxu0 0.0
        %1123 = vmatpush1.xpose.msra.mxu0 0.0
        %1124 = vmatprep.subr.mxu0 0.0
        %1125 = vmatpush1.xpose.msra.mxu0 0.0
        %1126 = vmatprep.subr.mxu0 0.0
        %1127 = vmatpush1.xpose.msra.mxu0 0.0
        %1128 = vmatprep.subr.mxu0 %v945
        %1129 = vmatpush1.xpose.msra.mxu0 %v943
        %1130 = vmatprep.subr.mxu0 %v939
        %1131 = vmatpush1.xpose.msra.mxu0 %v937
        %1132 = vmatprep.subr.mxu0 0.0
        %1133 = vmatpush2.xpose.msra.mxu0 0.0
        %1134 = vmatprep.subr.mxu0 0.0
        %1135 = vmatpush2.xpose.msra.mxu0 0.0
        %1136 = vmatprep.subr.mxu0 0.0
        %1137 = vmatpush2.xpose.msra.mxu0 0.0
        %1138 = vmatprep.subr.mxu0 0.0
        %1139 = vmatpush2.xpose.msra.mxu0 0.0
        %1140 = vmatprep.subr.mxu0 0.0
        %1141 = vmatpush2.xpose.msra.mxu0 0.0
        %1142 = vmatprep.subr.mxu0 0.0
        %1143 = vmatpush2.xpose.msra.mxu0 0.0
        %1144 = vmatprep.subr.mxu0 0.0
        %1145 = vmatpush2.xpose.msra.mxu0 0.0
        %1146 = vmatprep.subr.mxu0 0.0
        %1147 = vmatpush2.xpose.msra.mxu0 0.0
        %1148 = vmatprep.subr.mxu0 0.0
        %1149 = vmatpush2.xpose.msra.mxu0 0.0
        %1150 = vmatprep.subr.mxu0 0.0
        %1151 = vmatpush2.xpose.msra.mxu0 0.0
        %1152 = vmatprep.subr.mxu0 0.0
        %1153 = vmatpush2.xpose.msra.mxu0 0.0
        %1154 = vmatprep.subr.mxu0 0.0
        %1155 = vmatpush2.xpose.msra.mxu0 0.0
        %1156 = vmatprep.subr.mxu0 0.0
        %1157 = vmatpush2.xpose.msra.mxu0 0.0
        %1158 = vmatprep.subr.mxu0 0.0
        %1159 = vmatpush2.xpose.msra.mxu0 0.0
        %1160 = vmatprep.subr.mxu0 0.0
        %1161 = vmatpush2.xpose.msra.mxu0 0.0
        %1162 = vmatprep.subr.mxu0 0.0
        %1163 = vmatpush2.xpose.msra.mxu0 0.0
        %1164 = vmatprep.mubr.f32.mxu0 %v786
        %1165 = vmatmul.mubr.f32.gmra.mxu0 %v784
        %v1166 = vpop.f32.mrf.mxu0
        %v1167 = vadd.f32 0.0, %v1166
        %v1168 = vpop.f32.mrf.mxu0
        %1169 = vmatprep.mubr.f32.mxu0 %v792
        %1170 = vmatmul.mubr.f32.gmra.mxu0 %v790
        %v1171 = vpop.f32.mrf.mxu0
        %v1172 = vadd.f32 0.0, %v1171
        %v1173 = vpop.f32.mrf.mxu0
        %1174 = vdwg.mxu0
        %vm1175 = vcmask 130048
        %v1176 = vsel %vm1175, %v1167, -inf
        %1177 = vmax.xlane.f32.xlu0 %v1176
        %v1178 = vpop.xlane.xlu0 %1177
        %v1179 = vsel %vm1175, %v1172, -inf
        %1180 = vmax.xlane.f32.xlu0 %v1179
        %v1181 = vpop.xlane.xlu0 %1180
        %v1182 = vsub.f32 %v1167, %v1178
        %v1183 = vsub.f32 %v1172, %v1181
        %v1184 = vmul.f32 %v1182, 1.442695
        %v1185 = vpow.pop %v1184
        %v1186 = vmul.f32 %v1183, 1.442695
        %v1187 = vpow.pop %v1186
        %v1188 = vsel %vm1175, %v1185, 0.0
        %1189 = vadd.xlane.f32.xlu0 %v1188
        %v1190 = vpop.xlane.xlu0 %1189
        %v1191 = vsel %vm1175, %v1187, 0.0
        %1192 = vadd.xlane.f32.xlu0 %v1191
        %v1193 = vpop.xlane.xlu0 %1192
        %v1194 = vrcp.pop %v1190
        %v1195 = vrcp.pop %v1193
        %v1196 = vmul.f32 %v1185, %v1194
        %v1197 = vmul.f32 %v1187, %v1195
        %v1199 = vsel %vm1175, %v1196, 0
        %v1202 = vsel %vm1175, %v1197, 0
        %1204 = vmatprep.subr.mxu0 0.0
        %1205 = vmatpush1.msra.mxu0 0.0
        %1206 = vmatprep.subr.mxu0 0.0
        %1207 = vmatpush1.msra.mxu0 0.0
        %1208 = vmatprep.subr.mxu0 0.0
        %1209 = vmatpush1.msra.mxu0 0.0
        %1210 = vmatprep.subr.mxu0 0.0
        %1211 = vmatpush1.msra.mxu0 0.0
        %1212 = vmatprep.subr.mxu0 0.0
        %1213 = vmatpush1.msra.mxu0 0.0
        %1214 = vmatprep.subr.mxu0 0.0
        %1215 = vmatpush1.msra.mxu0 0.0
        %1216 = vmatprep.subr.mxu0 0.0
        %1217 = vmatpush1.msra.mxu0 0.0
        %1218 = vmatprep.subr.mxu0 0.0
        %1219 = vmatpush1.msra.mxu0 0.0
        %1220 = vmatprep.subr.mxu0 0.0
        %1221 = vmatpush1.msra.mxu0 0.0
        %1222 = vmatprep.subr.mxu0 0.0
        %1223 = vmatpush1.msra.mxu0 0.0
        %1224 = vmatprep.subr.mxu0 0.0
        %1225 = vmatpush1.msra.mxu0 0.0
        %1226 = vmatprep.subr.mxu0 0.0
        %1227 = vmatpush1.msra.mxu0 0.0
        %1228 = vmatprep.subr.mxu0 0.0
        %1229 = vmatpush1.msra.mxu0 0.0
        %1230 = vmatprep.subr.mxu0 0.0
        %1231 = vmatpush1.msra.mxu0 0.0
        %1232 = vmatprep.subr.mxu0 %v1098
        %1233 = vmatpush1.msra.mxu0 %v1096
        %1234 = vmatprep.subr.mxu0 %v1092
        %1235 = vmatpush1.msra.mxu0 %v1090
        %1236 = vmatprep.subr.mxu0 0.0
        %1237 = vmatpush2.msra.mxu0 0.0
        %1238 = vmatprep.subr.mxu0 0.0
        %1239 = vmatpush2.msra.mxu0 0.0
        %1240 = vmatprep.subr.mxu0 0.0
        %1241 = vmatpush2.msra.mxu0 0.0
        %1242 = vmatprep.subr.mxu0 0.0
        %1243 = vmatpush2.msra.mxu0 0.0
        %1244 = vmatprep.subr.mxu0 0.0
        %1245 = vmatpush2.msra.mxu0 0.0
        %1246 = vmatprep.subr.mxu0 0.0
        %1247 = vmatpush2.msra.mxu0 0.0
        %1248 = vmatprep.subr.mxu0 0.0
        %1249 = vmatpush2.msra.mxu0 0.0
        %1250 = vmatprep.subr.mxu0 0.0
        %1251 = vmatpush2.msra.mxu0 0.0
        %1252 = vmatprep.subr.mxu0 0.0
        %1253 = vmatpush2.msra.mxu0 0.0
        %1254 = vmatprep.subr.mxu0 0.0
        %1255 = vmatpush2.msra.mxu0 0.0
        %1256 = vmatprep.subr.mxu0 0.0
        %1257 = vmatpush2.msra.mxu0 0.0
        %1258 = vmatprep.subr.mxu0 0.0
        %1259 = vmatpush2.msra.mxu0 0.0
        %1260 = vmatprep.subr.mxu0 0.0
        %1261 = vmatpush2.msra.mxu0 0.0
        %1262 = vmatprep.subr.mxu0 0.0
        %1263 = vmatpush2.msra.mxu0 0.0
        %1264 = vmatprep.subr.mxu0 0.0
        %1265 = vmatpush2.msra.mxu0 0.0
        %1266 = vmatprep.subr.mxu0 0.0
        %1267 = vmatpush2.msra.mxu0 0.0
        %1268 = vmatprep.mubr.f32.mxu0 0.0
        %1269 = vmatmul.mubr.f32.gmra.mxu0 %v1199
        %v1270 = vpop.f32.mrf.mxu0
        %v1271 = vadd.f32 0.0, %v1270
        %v1272 = vpop.f32.mrf.mxu0
        %v1273 = vadd.f32 0.0, %v1272
        %1274 = vmatprep.mubr.f32.mxu0 0.0
        %1275 = vmatmul.mubr.f32.gmra.mxu0 %v1202
        %v1276 = vpop.f32.mrf.mxu0
        %v1277 = vadd.f32 0.0, %v1276
        %v1278 = vpop.f32.mrf.mxu0
        %v1279 = vadd.f32 0.0, %v1278
        %1280 = vdwg.mxu0
        %v1281 = vld [vmem:[#allocation2] sm:$0x1]
        %v1283 = vlaneseq
        %v1284 = vshrl.u32 %v1283, 7
        %v1285 = vsub.s32 0, %v1284
        %v1286 = vrot.slane %v1281, %v1285
        %1287 = vset.pattern.permute.xlu0 0
        %1288 = vperm.xlu0 %1287, %v1286
        %v1289 = vpop.permute.xlu0 %1288
        %v1291 = vmul.f32 %v1289, %v1271
        %v1292 = vmul.f32 %v1289, %v1273
        %v1293 = vmul.f32 %v1289, %v1277
        %v1294 = vmul.f32 %v1289, %v1279
        %v1295 = vadd.f32 %v1291, %v637
        %v1296 = vadd.f32 %v1292, %v638
        %v1297 = vadd.f32 %v1293, %v639
        %v1298 = vadd.f32 %v1294, %v640
        %v1299 = vld [vmem:[#allocation14] sm:$0xff]
        %v1300 = vld [vmem:[#allocation14 + $0x8] sm:$0xff]
        %v1301 = vld [vmem:[#allocation14 + $0x10] sm:$0xff]
        %v1302 = vld [vmem:[#allocation14 + $0x18] sm:$0xff]
        %v1303 = vld [vmem:[#allocation14 + $0x20] sm:$0xff]
        %v1304 = vld [vmem:[#allocation14 + $0x28] sm:$0xff]
        %v1305 = vld [vmem:[#allocation14 + $0x30] sm:$0xff]
        %v1306 = vld [vmem:[#allocation14 + $0x38] sm:$0xff]
        %v1307 = vld [vmem:[#allocation14 + $0x40] sm:$0xff]
        %v1308 = vld [vmem:[#allocation14 + $0x48] sm:$0xff]
        %v1309 = vld [vmem:[#allocation14 + $0x50] sm:$0xff]
        %v1310 = vld [vmem:[#allocation14 + $0x58] sm:$0xff]
        %v1311 = vld [vmem:[#allocation14 + $0x60] sm:$0xff]
        %v1312 = vld [vmem:[#allocation14 + $0x68] sm:$0xff]
        %v1313 = vld [vmem:[#allocation14 + $0x70] sm:$0xff]
        %v1314 = vld [vmem:[#allocation14 + $0x78] sm:$0xff]
        %v1315 = vld [vmem:[#allocation14 + $0x80] sm:$0xff]
        %v1316 = vld [vmem:[#allocation14 + $0x88] sm:$0xff]
        %v1317 = vld [vmem:[#allocation14 + $0x90] sm:$0xff]
        %v1318 = vld [vmem:[#allocation14 + $0x98] sm:$0xff]
        %v1319 = vld [vmem:[#allocation14 + $0xa0] sm:$0xff]
        %v1320 = vld [vmem:[#allocation14 + $0xa8] sm:$0xff]
        %v1321 = vld [vmem:[#allocation14 + $0xb0] sm:$0xff]
        %v1322 = vld [vmem:[#allocation14 + $0xb8] sm:$0xff]
        %v1323 = vld [vmem:[#allocation14 + $0xc0] sm:$0xff]
        %v1324 = vld [vmem:[#allocation14 + $0xc8] sm:$0xff]
        %v1325 = vld [vmem:[#allocation14 + $0xd0] sm:$0xff]
        %v1326 = vld [vmem:[#allocation14 + $0xd8] sm:$0xff]
        %v1327 = vld [vmem:[#allocation14 + $0xe0] sm:$0xff]
        %v1328 = vld [vmem:[#allocation14 + $0xe8] sm:$0xff]
        %v1329 = vld [vmem:[#allocation14 + $0xf0] sm:$0xff]
        %v1330 = vld [vmem:[#allocation14 + $0xf8] sm:$0xff]
        %v1331 = vld [vmem:[%s10] sm:$0x1]
        %v1333 = vlaneseq
        %v1334 = vshrl.u32 %v1333, 7
        %v1335 = vsub.s32 0, %v1334
        %v1336 = vrot.slane %v1331, %v1335
        %1338 = vmatprep.subr.mxu0 0.0
        %1339 = vmatpush1.msra.mxu0 %v1314
        %1340 = vmatprep.subr.mxu0 0.0
        %1341 = vmatpush1.msra.mxu0 %v1313
        %1342 = vmatprep.subr.mxu0 0.0
        %1343 = vmatpush1.msra.mxu0 %v1312
        %1344 = vmatprep.subr.mxu0 0.0
        %1345 = vmatpush1.msra.mxu0 %v1311
        %1346 = vmatprep.subr.mxu0 0.0
        %1347 = vmatpush1.msra.mxu0 %v1310
        %1348 = vmatprep.subr.mxu0 0.0
        %1349 = vmatpush1.msra.mxu0 %v1309
        %1350 = vmatprep.subr.mxu0 0.0
        %1351 = vmatpush1.msra.mxu0 %v1308
        %1352 = vmatprep.subr.mxu0 0.0
        %1353 = vmatpush1.msra.mxu0 %v1307
        %1354 = vmatprep.subr.mxu0 0.0
        %1355 = vmatpush1.msra.mxu0 %v1306
        %1356 = vmatprep.subr.mxu0 0.0
        %1357 = vmatpush1.msra.mxu0 %v1305
        %1358 = vmatprep.subr.mxu0 0.0
        %1359 = vmatpush1.msra.mxu0 %v1304
        %1360 = vmatprep.subr.mxu0 0.0
        %1361 = vmatpush1.msra.mxu0 %v1303
        %1362 = vmatprep.subr.mxu0 0.0
        %1363 = vmatpush1.msra.mxu0 %v1302
        %1364 = vmatprep.subr.mxu0 0.0
        %1365 = vmatpush1.msra.mxu0 %v1301
        %1366 = vmatprep.subr.mxu0 0.0
        %1367 = vmatpush1.msra.mxu0 %v1300
        %1368 = vmatprep.subr.mxu0 0.0
        %1369 = vmatpush1.msra.mxu0 %v1299
        %1370 = vmatprep.subr.mxu0 0.0
        %1371 = vmatpush2.msra.mxu0 %v1330
        %1372 = vmatprep.subr.mxu0 0.0
        %1373 = vmatpush2.msra.mxu0 %v1329
        %1374 = vmatprep.subr.mxu0 0.0
        %1375 = vmatpush2.msra.mxu0 %v1328
        %1376 = vmatprep.subr.mxu0 0.0
        %1377 = vmatpush2.msra.mxu0 %v1327
        %1378 = vmatprep.subr.mxu0 0.0
        %1379 = vmatpush2.msra.mxu0 %v1326
        %1380 = vmatprep.subr.mxu0 0.0
        %1381 = vmatpush2.msra.mxu0 %v1325
        %1382 = vmatprep.subr.mxu0 0.0
        %1383 = vmatpush2.msra.mxu0 %v1324
        %1384 = vmatprep.subr.mxu0 0.0
        %1385 = vmatpush2.msra.mxu0 %v1323
        %1386 = vmatprep.subr.mxu0 0.0
        %1387 = vmatpush2.msra.mxu0 %v1322
        %1388 = vmatprep.subr.mxu0 0.0
        %1389 = vmatpush2.msra.mxu0 %v1321
        %1390 = vmatprep.subr.mxu0 0.0
        %1391 = vmatpush2.msra.mxu0 %v1320
        %1392 = vmatprep.subr.mxu0 0.0
        %1393 = vmatpush2.msra.mxu0 %v1319
        %1394 = vmatprep.subr.mxu0 0.0
        %1395 = vmatpush2.msra.mxu0 %v1318
        %1396 = vmatprep.subr.mxu0 0.0
        %1397 = vmatpush2.msra.mxu0 %v1317
        %1398 = vmatprep.subr.mxu0 0.0
        %1399 = vmatpush2.msra.mxu0 %v1316
        %1400 = vmatprep.subr.mxu0 0.0
        %1401 = vmatpush2.msra.mxu0 %v1315
        %1402 = vmatprep.mubr.f32.mxu0 %v1296
        %1403 = vmatmul.mubr.f32.gmra.mxu0 %v1295
        %v1404 = vpop.f32.mrf.mxu0
        %v1405 = vadd.f32 %v1336, %v1404
        %v1406 = vpop.f32.mrf.mxu0
        %1407 = vmatprep.mubr.f32.mxu0 %v1298
        %1408 = vmatmul.mubr.f32.gmra.mxu0 %v1297
        %v1409 = vpop.f32.mrf.mxu0
        %v1410 = vadd.f32 %v1336, %v1409
        %v1411 = vpop.f32.mrf.mxu0
        %1412 = vdwg.mxu0
        %v1413 = vmax.f32 %v1405, 0.0
        %v1414 = vmax.f32 %v1410, 0.0
        %v1415 = vld [vmem:[#allocation15] sm:$0xff]
        %v1416 = vld [vmem:[#allocation15 + $0x8] sm:$0xff]
        %v1417 = vld [vmem:[#allocation15 + $0x10] sm:$0xff]
        %v1418 = vld [vmem:[#allocation15 + $0x18] sm:$0xff]
        %v1419 = vld [vmem:[#allocation15 + $0x20] sm:$0xff]
        %v1420 = vld [vmem:[#allocation15 + $0x28] sm:$0xff]
        %v1421 = vld [vmem:[#allocation15 + $0x30] sm:$0xff]
        %v1422 = vld [vmem:[#allocation15 + $0x38] sm:$0xff]
        %v1423 = vld [vmem:[#allocation15 + $0x40] sm:$0xff]
        %v1424 = vld [vmem:[#allocation15 + $0x48] sm:$0xff]
        %v1425 = vld [vmem:[#allocation15 + $0x50] sm:$0xff]
        %v1426 = vld [vmem:[#allocation15 + $0x58] sm:$0xff]
        %v1427 = vld [vmem:[#allocation15 + $0x60] sm:$0xff]
        %v1428 = vld [vmem:[#allocation15 + $0x68] sm:$0xff]
        %v1429 = vld [vmem:[#allocation15 + $0x70] sm:$0xff]
        %v1430 = vld [vmem:[#allocation15 + $0x78] sm:$0xff]
        %v1431 = vld [vmem:[%s12] sm:$0x1]
        %v1433 = vlaneseq
        %v1434 = vshrl.u32 %v1433, 7
        %v1435 = vsub.s32 0, %v1434
        %v1436 = vrot.slane %v1431, %v1435
        %1438 = vmatprep.subr.mxu0 0.0
        %1439 = vmatpush1.msra.mxu0 %v1430
        %1440 = vmatprep.subr.mxu0 0.0
        %1441 = vmatpush1.msra.mxu0 %v1429
        %1442 = vmatprep.subr.mxu0 0.0
        %1443 = vmatpush1.msra.mxu0 %v1428
        %1444 = vmatprep.subr.mxu0 0.0
        %1445 = vmatpush1.msra.mxu0 %v1427
        %1446 = vmatprep.subr.mxu0 0.0
        %1447 = vmatpush1.msra.mxu0 %v1426
        %1448 = vmatprep.subr.mxu0 0.0
        %1449 = vmatpush1.msra.mxu0 %v1425
        %1450 = vmatprep.subr.mxu0 0.0
        %1451 = vmatpush1.msra.mxu0 %v1424
        %1452 = vmatprep.subr.mxu0 0.0
        %1453 = vmatpush1.msra.mxu0 %v1423
        %1454 = vmatprep.subr.mxu0 0.0
        %1455 = vmatpush1.msra.mxu0 %v1422
        %1456 = vmatprep.subr.mxu0 0.0
        %1457 = vmatpush1.msra.mxu0 %v1421
        %1458 = vmatprep.subr.mxu0 0.0
        %1459 = vmatpush1.msra.mxu0 %v1420
        %1460 = vmatprep.subr.mxu0 0.0
        %1461 = vmatpush1.msra.mxu0 %v1419
        %1462 = vmatprep.subr.mxu0 0.0
        %1463 = vmatpush1.msra.mxu0 %v1418
        %1464 = vmatprep.subr.mxu0 0.0
        %1465 = vmatpush1.msra.mxu0 %v1417
        %1466 = vmatprep.subr.mxu0 0.0
        %1467 = vmatpush1.msra.mxu0 %v1416
        %1468 = vmatprep.subr.mxu0 0.0
        %1469 = vmatpush1.msra.mxu0 %v1415
        %1470 = vmatprep.subr.mxu0 0.0
        %1471 = vmatpush2.msra.mxu0 0.0
        %1472 = vmatprep.subr.mxu0 0.0
        %1473 = vmatpush2.msra.mxu0 0.0
        %1474 = vmatprep.subr.mxu0 0.0
        %1475 = vmatpush2.msra.mxu0 0.0
        %1476 = vmatprep.subr.mxu0 0.0
        %1477 = vmatpush2.msra.mxu0 0.0
        %1478 = vmatprep.subr.mxu0 0.0
        %1479 = vmatpush2.msra.mxu0 0.0
        %1480 = vmatprep.subr.mxu0 0.0
        %1481 = vmatpush2.msra.mxu0 0.0
        %1482 = vmatprep.subr.mxu0 0.0
        %1483 = vmatpush2.msra.mxu0 0.0
        %1484 = vmatprep.subr.mxu0 0.0
        %1485 = vmatpush2.msra.mxu0 0.0
        %1486 = vmatprep.subr.mxu0 0.0
        %1487 = vmatpush2.msra.mxu0 0.0
        %1488 = vmatprep.subr.mxu0 0.0
        %1489 = vmatpush2.msra.mxu0 0.0
        %1490 = vmatprep.subr.mxu0 0.0
        %1491 = vmatpush2.msra.mxu0 0.0
        %1492 = vmatprep.subr.mxu0 0.0
        %1493 = vmatpush2.msra.mxu0 0.0
        %1494 = vmatprep.subr.mxu0 0.0
        %1495 = vmatpush2.msra.mxu0 0.0
        %1496 = vmatprep.subr.mxu0 0.0
        %1497 = vmatpush2.msra.mxu0 0.0
        %1498 = vmatprep.subr.mxu0 0.0
        %1499 = vmatpush2.msra.mxu0 0.0
        %1500 = vmatprep.subr.mxu0 0.0
        %1501 = vmatpush2.msra.mxu0 0.0
        %1502 = vmatprep.mubr.f32.mxu0 0.0
        %1503 = vmatmul.mubr.f32.gmra.mxu0 %v1413
        %v1504 = vpop.f32.mrf.mxu0
        %v1505 = vadd.f32 %v1436, %v1504
        %v1506 = vpop.f32.mrf.mxu0
        %1507 = vmatprep.mubr.f32.mxu0 0.0
        %1508 = vmatmul.mubr.f32.gmra.mxu0 %v1414
        %v1509 = vpop.f32.mrf.mxu0
        %v1510 = vadd.f32 %v1436, %v1509
        %v1511 = vpop.f32.mrf.mxu0
        %1512 = vdwg.mxu0
        %v1513 = vmax.f32 %v1505, 0.0
        %v1514 = vmax.f32 %v1510, 0.0
        %v1515 = vld [vmem:[#allocation17] sm:$0xff]
        %v1516 = vld [vmem:[#allocation17 + $0x8] sm:$0xff]
        %v1517 = vld [vmem:[#allocation17 + $0x10] sm:$0xff]
        %v1518 = vld [vmem:[#allocation17 + $0x18] sm:$0xff]
        %v1519 = vld [vmem:[#allocation17 + $0x20] sm:$0xff]
        %v1520 = vld [vmem:[#allocation17 + $0x28] sm:$0xff]
        %v1521 = vld [vmem:[#allocation17 + $0x30] sm:$0xff]
        %v1522 = vld [vmem:[#allocation17 + $0x38] sm:$0xff]
        %v1523 = vld [vmem:[#allocation17 + $0x40] sm:$0xff]
        %v1524 = vld [vmem:[#allocation17 + $0x48] sm:$0xff]
        %v1525 = vld [vmem:[#allocation17 + $0x50] sm:$0xff]
        %v1526 = vld [vmem:[#allocation17 + $0x58] sm:$0xff]
        %v1527 = vld [vmem:[#allocation17 + $0x60] sm:$0xff]
        %v1528 = vld [vmem:[#allocation17 + $0x68] sm:$0xff]
        %v1529 = vld [vmem:[#allocation17 + $0x70] sm:$0xff]
        %v1530 = vld [vmem:[#allocation17 + $0x78] sm:$0xff]
        %v1531 = vld [vmem:[#allocation17 + $0x80] sm:$0xff]
        %v1532 = vld [vmem:[#allocation17 + $0x88] sm:$0xff]
        %v1533 = vld [vmem:[#allocation17 + $0x90] sm:$0xff]
        %v1534 = vld [vmem:[#allocation17 + $0x98] sm:$0xff]
        %v1535 = vld [vmem:[#allocation17 + $0xa0] sm:$0xff]
        %v1536 = vld [vmem:[#allocation17 + $0xa8] sm:$0xff]
        %v1537 = vld [vmem:[#allocation17 + $0xb0] sm:$0xff]
        %v1538 = vld [vmem:[#allocation17 + $0xb8] sm:$0xff]
        %v1539 = vld [vmem:[#allocation17 + $0xc0] sm:$0xff]
        %v1540 = vld [vmem:[#allocation17 + $0xc8] sm:$0xff]
        %v1541 = vld [vmem:[#allocation17 + $0xd0] sm:$0xff]
        %v1542 = vld [vmem:[#allocation17 + $0xd8] sm:$0xff]
        %v1543 = vld [vmem:[#allocation17 + $0xe0] sm:$0xff]
        %v1544 = vld [vmem:[#allocation17 + $0xe8] sm:$0xff]
        %v1545 = vld [vmem:[#allocation17 + $0xf0] sm:$0xff]
        %v1546 = vld [vmem:[#allocation17 + $0xf8] sm:$0xff]
        %v1547 = vld [vmem:[%s14] sm:$0x3]
        %v1549 = vlaneseq
        %v1550 = vshrl.u32 %v1549, 7
        %v1551 = vsub.s32 0, %v1550
        %v1552 = vrot.slane %v1547, %v1551
        %v1553 = vlaneseq
        %v1554 = vshrl.u32 %v1553, 7
        %v1555 = vsub.s32 1, %v1554
        %v1556 = vrot.slane %v1547, %v1555
        %1559 = vmatprep.subr.mxu0 %v1546
        %1560 = vmatpush1.msra.mxu0 %v1545
        %1561 = vmatprep.subr.mxu0 %v1544
        %1562 = vmatpush1.msra.mxu0 %v1543
        %1563 = vmatprep.subr.mxu0 %v1542
        %1564 = vmatpush1.msra.mxu0 %v1541
        %1565 = vmatprep.subr.mxu0 %v1540
        %1566 = vmatpush1.msra.mxu0 %v1539
        %1567 = vmatprep.subr.mxu0 %v1538
        %1568 = vmatpush1.msra.mxu0 %v1537
        %1569 = vmatprep.subr.mxu0 %v1536
        %1570 = vmatpush1.msra.mxu0 %v1535
        %1571 = vmatprep.subr.mxu0 %v1534
        %1572 = vmatpush1.msra.mxu0 %v1533
        %1573 = vmatprep.subr.mxu0 %v1532
        %1574 = vmatpush1.msra.mxu0 %v1531
        %1575 = vmatprep.subr.mxu0 %v1530
        %1576 = vmatpush1.msra.mxu0 %v1529
        %1577 = vmatprep.subr.mxu0 %v1528
        %1578 = vmatpush1.msra.mxu0 %v1527
        %1579 = vmatprep.subr.mxu0 %v1526
        %1580 = vmatpush1.msra.mxu0 %v1525
        %1581 = vmatprep.subr.mxu0 %v1524
        %1582 = vmatpush1.msra.mxu0 %v1523
        %1583 = vmatprep.subr.mxu0 %v1522
        %1584 = vmatpush1.msra.mxu0 %v1521
        %1585 = vmatprep.subr.mxu0 %v1520
        %1586 = vmatpush1.msra.mxu0 %v1519
        %1587 = vmatprep.subr.mxu0 %v1518
        %1588 = vmatpush1.msra.mxu0 %v1517
        %1589 = vmatprep.subr.mxu0 %v1516
        %1590 = vmatpush1.msra.mxu0 %v1515
        %1591 = vmatprep.subr.mxu0 0.0
        %1592 = vmatpush2.msra.mxu0 0.0
        %1593 = vmatprep.subr.mxu0 0.0
        %1594 = vmatpush2.msra.mxu0 0.0
        %1595 = vmatprep.subr.mxu0 0.0
        %1596 = vmatpush2.msra.mxu0 0.0
        %1597 = vmatprep.subr.mxu0 0.0
        %1598 = vmatpush2.msra.mxu0 0.0
        %1599 = vmatprep.subr.mxu0 0.0
        %1600 = vmatpush2.msra.mxu0 0.0
        %1601 = vmatprep.subr.mxu0 0.0
        %1602 = vmatpush2.msra.mxu0 0.0
        %1603 = vmatprep.subr.mxu0 0.0
        %1604 = vmatpush2.msra.mxu0 0.0
        %1605 = vmatprep.subr.mxu0 0.0
        %1606 = vmatpush2.msra.mxu0 0.0
        %1607 = vmatprep.subr.mxu0 0.0
        %1608 = vmatpush2.msra.mxu0 0.0
        %1609 = vmatprep.subr.mxu0 0.0
        %1610 = vmatpush2.msra.mxu0 0.0
        %1611 = vmatprep.subr.mxu0 0.0
        %1612 = vmatpush2.msra.mxu0 0.0
        %1613 = vmatprep.subr.mxu0 0.0
        %1614 = vmatpush2.msra.mxu0 0.0
        %1615 = vmatprep.subr.mxu0 0.0
        %1616 = vmatpush2.msra.mxu0 0.0
        %1617 = vmatprep.subr.mxu0 0.0
        %1618 = vmatpush2.msra.mxu0 0.0
        %1619 = vmatprep.subr.mxu0 0.0
        %1620 = vmatpush2.msra.mxu0 0.0
        %1621 = vmatprep.subr.mxu0 0.0
        %1622 = vmatpush2.msra.mxu0 0.0
        %1623 = vmatprep.mubr.f32.mxu0 0.0
        %1624 = vmatmul.mubr.f32.gmra.mxu0 %v1513
        %v1625 = vpop.f32.mrf.mxu0
        %v1626 = vadd.f32 %v1552, %v1625
        %v1627 = vpop.f32.mrf.mxu0
        %v1628 = vadd.f32 %v1556, %v1627
        %1629 = vmatprep.mubr.f32.mxu0 0.0
        %1630 = vmatmul.mubr.f32.gmra.mxu0 %v1514
        %v1631 = vpop.f32.mrf.mxu0
        %v1632 = vadd.f32 %v1552, %v1631
        %v1633 = vpop.f32.mrf.mxu0
        %v1634 = vadd.f32 %v1556, %v1633
        %1635 = vdwg.mxu0
        %v1636 = vadd.f32 %v1626, %v1295
        %v1637 = vadd.f32 %v1628, %v1296
        %v1638 = vadd.f32 %v1632, %v1297
        %v1639 = vadd.f32 %v1634, %v1298
        %1640 = vst [vmem:[%s628] sm:$0xff] %v1636
        %1641 = vst [vmem:[%s628 + $0x8] sm:$0xff] %v1637
        %1642 = vst [vmem:[%s628 + $0x10] sm:$0xff] %v1638
        %1643 = vst [vmem:[%s628 + $0x18] sm:$0xff] %v1639
        %s1644 = sand.u32 %s366, 1
        %s1645 = scalar_lea.sflag [#allocation5], %s1644
        %s1646 = sand.u32 %s366, 1
        %s1647 = smul.addr %s1646, 32
        %s1648 = scalar_lea.vmem [#allocation18], %s1647
        // Predicated region
        $region117: #{_lambda_.1} parent=79 // pred_check
          %p1649 = pneg %p376
        $region118: #{_lambda_.1} parent=79 // pred_check_branch
          %1651 = sbr.rel (%p1649) target = $region120
        $region119: #{_lambda_.1} parent=79 // pred_region
          %s1653 = ssub.s32 512, 512
          %1654 = vsyncadd %s1645, %s1653
          %s1655 = smul.addr %s38, 4
          %s1656 = smul.addr %s1655, 128
          %s1657 = scalar_lea.hbm %s15, %s1656
          %s1658 = sshll.u32 %s1648, 4
          %s1659 = int_to_ptr.vmem [resolvable:$true] %s1658
          %1664 = dma.vmem_to_hbm [thread:$0]  %s1659, 512, %s1657, %s1645, 256, 256, 16
        $region120: #{_lambda_.1} parent=79 // pred_fallthru
          _
      $region80: #{_lambda_.1} parent=5 // pred_fallthru
        _
      %p1665 = scmp.le.s32.totalorder 2, %s33
      // Predicated region
      $region121: #{_lambda_.1} parent=5 // pred_check
        %p1666 = pneg %p1665
      $region122: #{_lambda_.1} parent=5 // pred_check_branch
        %1668 = sbr.rel (%p1666) target = $region124
      $region123: #{_lambda_.1} parent=5 // pred_region
        %s1669 = ssub.s32 %s33, 2
        // Predicated region
        $region125: #{_lambda_.1} parent=123 // pred_check
          %p1670 = pneg %p382
        $region126: #{_lambda_.1} parent=123 // pred_check_branch
          %1672 = sbr.rel (%p1670) target = $region128
        $region127: #{_lambda_.1} parent=123 // pred_region
          %s1673 = sand.u32 %s367, 1
          %s1674 = scalar_lea.sflag [#allocation5], %s1673
          %s1675 = sand.u32 %s367, 1
          %s1676 = smul.addr %s1675, 32
          %s1677 = scalar_lea.vmem [#allocation18], %s1676
          %1678 = dma.done %s1674, 512
        $region128: #{_lambda_.1} parent=123 // pred_fallthru
          _
      $region124: #{_lambda_.1} parent=5 // pred_fallthru
        _
    $region6: #{_lambda_.1} parent=1 // loop_footer
      %s37 = sadd.s32 1, %s33
    $region7: #{_lambda_.1} parent=1 // loop_footer_branch
      %32 = sbr.rel target = $region3
    $region8: #{_lambda_.1} parent=1 // loop_exit
      _
    %1679 = vsyncpa [#allocation4], 1
    %s1680 = scalar_lea.sflag [#allocation4], 1
    %1681 = vsyncpa %s1680, 1
    %1682 = vsyncpa [#allocation7], 1
    %1683 = vsyncpa [#allocation10], 1
    %1684 = vsyncpa [#allocation13], 1
    %1685 = vsyncpa [#allocation16], 1
    %1686 = vsyncpa [#allocation5], 1
    %s1687 = scalar_lea.sflag [#allocation5], 1
    %1688 = vsyncpa %s1687, 1

</llo_original>
